<compile_context>
chip_gen: v7x
topology: tpu7x:2x2x1
jax: 0.10.0
libtpu: 0.0.40
codegen_flags: <defaults>
</compile_context>

<pallas_src>
import jax
import jax.numpy as jnp
from jax.experimental import pallas as pl
from jax.experimental.pallas import tpu as pltpu


def _round_up(x, m):
    return ((x + m - 1) // m) * m


# ----------------------------------------------------------------------------
# Kernel
# ----------------------------------------------------------------------------
def make_mlp_kernel(n_cat, num_hidden):
    """Fused eval-mode MLPRegressor in (feature, batch) transposed layout.

    Ref order:  x_cat_T, x_cont_T,
                tab_0..tab_{n_cat-1}, Wc, b1,              (layer 1, f32)
                (W_2, b_2) ... (W_L, b_L),                 (bf16 weights)
                (W_out, b_out),                            (f32)
                out_ref
    Every parameter block has a constant index_map -> stays VMEM-resident.
    """

    def kernel(xcat_ref, xcont_ref, *refs):
        out_ref = refs[-1]
        p = refs[:-1]
        tile_b = out_ref.shape[-1]          # TB (lane axis, multiple of 128)
        pi = 0

        # ---- layer 1: embedding lookup as one-hot matmuls + folded cont BN --
        # tables are pre-multiplied with the first Linear, so each categorical
        # feature contributes  T'_i^T @ onehot_i^T  directly to h1^T (f32).
        cat = xcat_ref[...]                                 # (n_cat, TB) int32
        acc = None
        for f in range(n_cat):
            tab = p[pi][...]                                # (H1p, nip) f32
            pi += 1
            nip = tab.shape[1]
            ids = cat[f:f + 1, :]                           # (1, TB)
            iota = jax.lax.broadcasted_iota(jnp.int32, (nip, tile_b), 0)
            onehot = (iota == ids).astype(jnp.float32)      # (nip, TB) exact 0/1
            contrib = jnp.dot(tab, onehot, preferred_element_type=jnp.float32)
            acc = contrib if acc is None else acc + contrib

        wc = p[pi][...]                                     # (H1p, ncont_pad) f32
        b1 = p[pi + 1][...]                                 # (H1p, 1) f32
        pi += 2
        acc = acc + jnp.dot(wc, xcont_ref[...],
                            preferred_element_type=jnp.float32) + b1
        h = jnp.maximum(acc, 0.0)                           # (H1p, TB) f32

        # ---- hidden layers 2..L: bf16 MXU inputs, f32 accumulation ----------
        for _ in range(num_hidden - 1):
            w = p[pi][...]                                  # (Np, Kp) bf16
            b = p[pi + 1][...]                              # (Np, 1) f32
            pi += 2
            a = jnp.dot(w, h.astype(w.dtype),
                        preferred_element_type=jnp.float32) + b
            h = jnp.maximum(a, 0.0)

        # ---- output Linear (kept f32; lane-dense (out_pad, TB) store) -------
        w_out = p[pi][...]                                  # (out_pad, Kp) f32
        b_out = p[pi + 1][...]                              # (out_pad, 1) f32
        out_ref[...] = (jnp.dot(w_out, h, preferred_element_type=jnp.float32)
                        + b_out).astype(out_ref.dtype)

    return kernel


# ----------------------------------------------------------------------------
# One-time parameter preparation: BN folding, table folding, padding, transpose
# ----------------------------------------------------------------------------
def prepare_fused_params(params, eps=1e-5, compute_dtype=jnp.bfloat16):
    """Fold eval-mode BN + embedding tables into the Linear weights, then pad
    to MXU/vreg-friendly shapes and transpose to the (out, in) layout used by
    the transposed kernel.  Zero padding keeps the math exact."""

    def fold_bn(gamma, beta, mean, var):
        scale = gamma / jnp.sqrt(var + eps)
        shift = beta - mean * scale
        return scale, shift

    emb_tables = [t.astype(jnp.float32) for t in params["emb_tables"]]
    vocabs = [int(t.shape[0]) for t in emb_tables]
    emb_dims = [int(t.shape[1]) for t in emb_tables]
    n_emb = sum(emb_dims)
    n_cont = int(params["bn_cont"][0].shape[0])

    hidden = params["hidden"]
    W_out_raw, b_out_raw = params["out"]
    Ws = [W for (W, _, _) in hidden] + [W_out_raw]
    bs = [b for (_, b, _) in hidden] + [b_out_raw]
    bns = [bn for (_, _, bn) in hidden]
    hidden_widths = [int(W.shape[1]) for W in Ws[:-1]]
    out_sz = int(W_out_raw.shape[1])

    # Layer 1: fold cont-BN and each embedding table into the first Linear.
    #   x_in @ W1 = sum_i onehot_i @ (T_i @ W1_emb_i)
    #             + x_cont @ (diag(s_c) @ W1_cont) + (sh_c @ W1_cont)
    W1 = Ws[0].astype(jnp.float32)
    b1 = bs[0].astype(jnp.float32)
    c_scale, c_shift = fold_bn(*params["bn_cont"])
    W1_cont = W1[n_emb:, :]
    b1_eff = b1 + c_shift @ W1_cont
    Wc_eff = W1_cont * c_scale[:, None]                     # (n_cont, H1)
    tabs_eff, off = [], 0
    for t, d in zip(emb_tables, emb_dims):
        tabs_eff.append(t @ W1[off:off + d, :])             # (ni, H1)
        off += d

    # Fold each post-ReLU BatchNorm into the NEXT Linear (layers 2..L and out):
    #   (relu(x)*s + sh) @ W + b = relu(x) @ (diag(s) @ W) + (sh @ W + b)
    folded = []
    for j in range(1, len(Ws)):
        W = Ws[j].astype(jnp.float32)
        b = bs[j].astype(jnp.float32)
        s, sh = fold_bn(*bns[j - 1])
        folded.append((W * s[:, None], b + sh @ W))

    # Padding targets: hidden widths -> 128 lanes; contraction dims -> 8/16
    # sublanes; output rows -> 8 (dense stores + safe MXU M dim).
    H_pads = [_round_up(h, 128) for h in hidden_widths]
    H1_pad = H_pads[0]
    ncont_pad = _round_up(n_cont, 8)
    out_pad = _round_up(out_sz, 8)
    vocab_pads = [_round_up(v, 8) for v in vocabs]

    def pad2(a, rows, cols):
        return jnp.pad(a, ((0, rows - a.shape[0]), (0, cols - a.shape[1])))

    tabs_T = [pad2(t, vp, H1_pad).T for t, vp in zip(tabs_eff, vocab_pads)]
    wc_T = pad2(Wc_eff, ncont_pad, H1_pad).T                # (H1p, ncont_pad)
    b1_col = jnp.pad(b1_eff, (0, H1_pad - b1_eff.shape[0]))[:, None]

    hidden_T = []
    for j, (W_eff, b_eff) in enumerate(folded[:-1]):        # layers 2..L (bf16)
        Kp, Np = H_pads[j], H_pads[j + 1]
        hidden_T.append(
            (pad2(W_eff, Kp, Np).T.astype(compute_dtype),
             jnp.pad(b_eff, (0, Np - b_eff.shape[0]))[:, None].astype(jnp.float32)))

    W_out_eff, b_out_eff = folded[-1]
    w_out_T = pad2(W_out_eff, H_pads[-1], out_pad).T        # (out_pad, Kp) f32
    b_out_col = jnp.pad(b_out_eff, (0, out_pad - out_sz))[:, None]

    param_list = (list(tabs_T) + [wc_T, b1_col]
                  + [x for wb in hidden_T for x in wb]
                  + [w_out_T, b_out_col])

    weight_mats = tabs_T + [wc_T] + [w for (w, _) in hidden_T] + [w_out_T]
    macs_per_row = int(sum(int(w.shape[0]) * int(w.shape[1]) for w in weight_mats))

    return {
        "param_list": param_list,
        "n_cat": len(emb_tables),
        "n_cont": n_cont,
        "n_cont_pad": ncont_pad,
        "num_hidden": len(hidden_widths),
        "out_sz": out_sz,
        "out_pad": out_pad,
        "macs_per_row": macs_per_row,
    }


# ----------------------------------------------------------------------------
# Forward: one batch-tiled pallas_call (gather happens in-kernel)
# ----------------------------------------------------------------------------
def mlp_regressor_forward(x_cat, x_cont, fused, *, tb=1024,
                          single_buffer_weights=False):
    n_cat = fused["n_cat"]
    n_cont = fused["n_cont"]
    ncont_pad = fused["n_cont_pad"]
    out_sz, out_pad = fused["out_sz"], fused["out_pad"]
    params = fused["param_list"]

    B = x_cat.shape[0]
    tb = _round_up(tb, 128)                  # TB must be lane-aligned
    TB = tb if B >= tb else _round_up(B, 128)
    B_pad = _round_up(B, TB)

    # Feature-major ("transposed") inputs: batch lives on the lane axis, so
    # the output block is naturally lane-dense and no in-kernel transpose is
    # ever needed.  Only ~20 B/row is streamed (int32 codes + f32 cont feats).
    xcat_t = jnp.pad(x_cat.astype(jnp.int32).T, ((0, 0), (0, B_pad - B)))
    xcont_t = jnp.pad(x_cont.astype(jnp.float32).T,
                      ((0, ncont_pad - n_cont), (0, B_pad - B)))

    grid = (B_pad // TB,)

    # v7x lever (64 MiB VMEM): resident blocks need no double buffer.  The
    # weights here are KB-scale, so it is off by default; enable when hidden
    # widths reach ~2048.
    resident_kwargs = (
        dict(pipeline_mode=pl.Buffered(1)) if single_buffer_weights else {})

    # Streamed activations (double-buffered by the auto-pipeliner).  If the
    # per-step compute ever fails to hide the DMA, bump these to
    # pipeline_mode=pl.Buffered(3).
    in_specs = [pl.BlockSpec((n_cat, TB), lambda i: (0, i)),
                pl.BlockSpec((ncont_pad, TB), lambda i: (0, i))]
    # VMEM-resident parameters (constant index_map -> fetched once).
    for p_arr in params:
        in_specs.append(pl.BlockSpec(p_arr.shape, lambda i: (0, 0),
                                     **resident_kwargs))

    out_spec = pl.BlockSpec((out_pad, TB), lambda i: (0, i))   # lane-dense

    bytes_accessed = int(
        xcat_t.size * 4 + xcont_t.size * 4
        + sum(int(p.size) * p.dtype.itemsize for p in params)
        + out_pad * B_pad * 4)
    cost = pl.CostEstimate(flops=2 * fused["macs_per_row"] * B_pad,
                           transcendentals=0,
                           bytes_accessed=bytes_accessed)

    out_t = pl.pallas_call(
        make_mlp_kernel(n_cat, fused["num_hidden"]),
        out_shape=jax.ShapeDtypeStruct((out_pad, B_pad), jnp.float32),
        grid=grid,
        in_specs=in_specs,
        out_specs=out_spec,
        compiler_params=pltpu.CompilerParams(
            dimension_semantics=("parallel",),      # batch axis (v7x 2-TC)
            vmem_limit_bytes=64 * 1024 * 1024),
        cost_estimate=cost,
    )(xcat_t, xcont_t, *params)

    return out_t[:out_sz, :B].T                      # (B, out_sz)


# ----------------------------------------------------------------------------
# Pure-JAX reference (eval mode, f32, unfolded) for correctness checking
# ----------------------------------------------------------------------------
def reference_forward(x_cat, x_cont, params):
    eps = 1e-5
    emb_cols = [jnp.take(t, x_cat[:, i], axis=0)
                for i, t in enumerate(params["emb_tables"])]
    x = jnp.concatenate(emb_cols, axis=1)

    g, b_, m, v = params["bn_cont"]
    xc = (x_cont - m) / jnp.sqrt(v + eps) * g + b_
    x = jnp.concatenate([x, xc], axis=1)

    for (W, bias, (g, b_, m, v)) in params["hidden"]:
        x = x @ W + bias
        x = jnp.maximum(x, 0.0)
        x = (x - m) / jnp.sqrt(v + eps) * g + b_
    W, bias = params["out"]
    return x @ W + bias


# ----------------------------------------------------------------------------
# Param init (matches the PyTorch module's structure, eval-mode BN stats)
# ----------------------------------------------------------------------------
def init_params(key, emb_szs, n_cont, out_sz, layers):
    params = {}
    keys = jax.random.split(key, 16)
    ki = iter(keys)

    params["emb_tables"] = [
        jax.random.normal(next(ki), (ni, nf), jnp.float32) * 0.5 for ni, nf in emb_szs
    ]

    def bn_params(k, n):
        k1, k2, k3, k4 = jax.random.split(k, 4)
        gamma = 1.0 + 0.1 * jax.random.normal(k1, (n,), jnp.float32)
        beta = 0.1 * jax.random.normal(k2, (n,), jnp.float32)
        mean = 0.1 * jax.random.normal(k3, (n,), jnp.float32)
        var = jnp.abs(1.0 + 0.1 * jax.random.normal(k4, (n,), jnp.float32))
        return (gamma, beta, mean, var)

    params["bn_cont"] = bn_params(next(ki), n_cont)

    n_emb = sum(nf for _, nf in emb_szs)
    n_in = n_emb + n_cont
    hidden = []
    for h in layers:
        kw, kb, kbn = jax.random.split(next(ki), 3)
        W = jax.random.normal(kw, (n_in, h), jnp.float32) / jnp.sqrt(n_in)
        bias = 0.01 * jax.random.normal(kb, (h,), jnp.float32)
        hidden.append((W, bias, bn_params(kbn, h)))
        n_in = h
    params["hidden"] = hidden

    kw, kb = jax.random.split(next(ki), 2)
    W_out = jax.random.normal(kw, (layers[-1], out_sz), jnp.float32) / jnp.sqrt(layers[-1])
    b_out = 0.01 * jax.random.normal(kb, (out_sz,), jnp.float32)
    params["out"] = (W_out, b_out)
    return params


if __name__ == "__main__":
    # Small config consistent with the module's __init__ signature.
    emb_szs = [(10, 4), (8, 3), (6, 2)]   # n_emb = 9
    n_cont = 4
    out_sz = 1
    layers = [32, 16]
    B = 333                                # not tile-aligned -> exercises padding

    key = jax.random.PRNGKey(0)
    k_params, k_cat, k_cont = jax.random.split(key, 3)
    params = init_params(k_params, emb_szs, n_cont, out_sz, layers)
    fused = prepare_fused_params(params)   # one-time fold + pad + transpose

    x_cat = jnp.stack(
        [jax.random.randint(jax.random.fold_in(k_cat, i), (B,), 0, ni, dtype=jnp.int32)
         for i, (ni, _) in enumerate(emb_szs)],
        axis=1,
    )  # (B, n_cat) int32
    x_cont = jax.random.normal(k_cont, (B, n_cont), jnp.float32)

    # Small tile so the example exercises multiple grid steps + tail padding.
    out = mlp_regressor_forward(x_cat, x_cont, fused, tb=128)
    out = jax.block_until_ready(out)

    ref = reference_forward(x_cat, x_cont, params)
    assert out.shape == (B, out_sz)
    # Only the interior hidden layers use bf16; layer 1 and the output Linear
    # stay f32, so the tolerance comfortably covers the single rounding point.
    assert jnp.allclose(out, ref, atol=5e-2, rtol=5e-2), (
        "mismatch vs JAX reference: max abs err = "
        f"{float(jnp.max(jnp.abs(out - ref)))}")

    print("KERNEL_OK")
</pallas_src>

<mosaic_0001>
module attributes {stable_mosaic.version = 11 : i64} {
  func.func @kernel(%arg0: i32, %arg1: memref<3x128xi32, #tpu.memory_space<vmem>>, %arg2: memref<8x128xf32, #tpu.memory_space<vmem>>, %arg3: memref<128x16xf32, #tpu.memory_space<vmem>>, %arg4: memref<128x8xf32, #tpu.memory_space<vmem>>, %arg5: memref<128x8xf32, #tpu.memory_space<vmem>>, %arg6: memref<128x8xf32, #tpu.memory_space<vmem>>, %arg7: memref<128x1xf32, #tpu.memory_space<vmem>>, %arg8: memref<128x128xbf16, #tpu.memory_space<vmem>>, %arg9: memref<128x1xf32, #tpu.memory_space<vmem>>, %arg10: memref<8x128xf32, #tpu.memory_space<vmem>>, %arg11: memref<8x1xf32, #tpu.memory_space<vmem>>, %arg12: memref<8x128xf32, #tpu.memory_space<vmem>>) attributes {dimension_semantics = [#tpu.dimension_semantics<parallel>], iteration_bounds = array<i64: 3>, scalar_prefetch = 0 : i64, scratch_operands = 0 : i64, tpu.core_type = #tpu.core_type<tc>, window_params = [{transform_indices = @transform_0, window_bounds = array<i64: 3, 128>}, {transform_indices = @transform_1, window_bounds = array<i64: 8, 128>}, {pipeline_mode = #tpu.pipeline_mode<synchronous>, transform_indices = @transform_2, window_bounds = array<i64: 128, 16>}, {pipeline_mode = #tpu.pipeline_mode<synchronous>, transform_indices = @transform_3, window_bounds = array<i64: 128, 8>}, {pipeline_mode = #tpu.pipeline_mode<synchronous>, transform_indices = @transform_4, window_bounds = array<i64: 128, 8>}, {pipeline_mode = #tpu.pipeline_mode<synchronous>, transform_indices = @transform_5, window_bounds = array<i64: 128, 8>}, {pipeline_mode = #tpu.pipeline_mode<synchronous>, transform_indices = @transform_6, window_bounds = array<i64: 128, 1>}, {pipeline_mode = #tpu.pipeline_mode<synchronous>, transform_indices = @transform_7, window_bounds = array<i64: 128, 128>}, {pipeline_mode = #tpu.pipeline_mode<synchronous>, transform_indices = @transform_8, window_bounds = array<i64: 128, 1>}, {pipeline_mode = #tpu.pipeline_mode<synchronous>, transform_indices = @transform_9, window_bounds = array<i64: 8, 128>}, {pipeline_mode = #tpu.pipeline_mode<synchronous>, transform_indices = @transform_10, window_bounds = array<i64: 8, 1>}, {transform_indices = @transform_11, window_bounds = array<i64: 8, 128>}]} {
    %c0 = arith.constant 0 : index
    %c0_0 = arith.constant 0 : index
    %0 = vector.load %arg1[%c0, %c0_0] : memref<3x128xi32, #tpu.memory_space<vmem>>, vector<3x128xi32>
    %c0_1 = arith.constant 0 : index
    %c0_2 = arith.constant 0 : index
    %1 = vector.load %arg3[%c0_1, %c0_2] : memref<128x16xf32, #tpu.memory_space<vmem>>, vector<128x16xf32>
    %2 = vector.extract_strided_slice %0 {offsets = [0, 0], sizes = [1, 128], strides = [1, 1]} : vector<3x128xi32> to vector<1x128xi32>
    %3 = tpu.iota {dimensions = array<i32: 0>} : vector<16x128xi32>
    %4 = vector.broadcast %2 : vector<1x128xi32> to vector<16x128xi32>
    %5 = arith.cmpi eq, %3, %4 : vector<16x128xi32>
    %6 = arith.extui %5 : vector<16x128xi1> to vector<16x128xi32>
    %7 = arith.sitofp %6 : vector<16x128xi32> to vector<16x128xf32>
    %cst = arith.constant dense<0.000000e+00> : vector<128x128xf32>
    %8 = tpu.matmul %1, %7, %cst {dimension_numbers = #tpu.dot_dimension_numbers<[1], [0], [0], [1], [0, 0, 1, 1], [], []>} : vector<128x16xf32>, vector<16x128xf32>, vector<128x128xf32> -> vector<128x128xf32>
    %c0_3 = arith.constant 0 : index
    %c0_4 = arith.constant 0 : index
    %9 = vector.load %arg4[%c0_3, %c0_4] : memref<128x8xf32, #tpu.memory_space<vmem>>, vector<128x8xf32>
    %10 = vector.extract_strided_slice %0 {offsets = [1, 0], sizes = [1, 128], strides = [1, 1]} : vector<3x128xi32> to vector<1x128xi32>
    %11 = tpu.iota {dimensions = array<i32: 0>} : vector<8x128xi32>
    %12 = vector.broadcast %10 : vector<1x128xi32> to vector<8x128xi32>
    %13 = arith.cmpi eq, %11, %12 : vector<8x128xi32>
    %14 = arith.extui %13 : vector<8x128xi1> to vector<8x128xi32>
    %15 = arith.sitofp %14 : vector<8x128xi32> to vector<8x128xf32>
    %cst_5 = arith.constant dense<0.000000e+00> : vector<128x128xf32>
    %16 = tpu.matmul %9, %15, %cst_5 {dimension_numbers = #tpu.dot_dimension_numbers<[1], [0], [0], [1], [0, 0, 1, 1], [], []>} : vector<128x8xf32>, vector<8x128xf32>, vector<128x128xf32> -> vector<128x128xf32>
    %17 = arith.addf %8, %16 : vector<128x128xf32>
    %c0_6 = arith.constant 0 : index
    %c0_7 = arith.constant 0 : index
    %18 = vector.load %arg5[%c0_6, %c0_7] : memref<128x8xf32, #tpu.memory_space<vmem>>, vector<128x8xf32>
    %19 = vector.extract_strided_slice %0 {offsets = [2, 0], sizes = [1, 128], strides = [1, 1]} : vector<3x128xi32> to vector<1x128xi32>
    %20 = tpu.iota {dimensions = array<i32: 0>} : vector<8x128xi32>
    %21 = vector.broadcast %19 : vector<1x128xi32> to vector<8x128xi32>
    %22 = arith.cmpi eq, %20, %21 : vector<8x128xi32>
    %23 = arith.extui %22 : vector<8x128xi1> to vector<8x128xi32>
    %24 = arith.sitofp %23 : vector<8x128xi32> to vector<8x128xf32>
    %cst_8 = arith.constant dense<0.000000e+00> : vector<128x128xf32>
    %25 = tpu.matmul %18, %24, %cst_8 {dimension_numbers = #tpu.dot_dimension_numbers<[1], [0], [0], [1], [0, 0, 1, 1], [], []>} : vector<128x8xf32>, vector<8x128xf32>, vector<128x128xf32> -> vector<128x128xf32>
    %26 = arith.addf %17, %25 : vector<128x128xf32>
    %c0_9 = arith.constant 0 : index
    %c0_10 = arith.constant 0 : index
    %27 = vector.load %arg6[%c0_9, %c0_10] : memref<128x8xf32, #tpu.memory_space<vmem>>, vector<128x8xf32>
    %c0_11 = arith.constant 0 : index
    %c0_12 = arith.constant 0 : index
    %28 = vector.load %arg7[%c0_11, %c0_12] : memref<128x1xf32, #tpu.memory_space<vmem>>, vector<128x1xf32>
    %c0_13 = arith.constant 0 : index
    %c0_14 = arith.constant 0 : index
    %29 = vector.load %arg2[%c0_13, %c0_14] : memref<8x128xf32, #tpu.memory_space<vmem>>, vector<8x128xf32>
    %cst_15 = arith.constant dense<0.000000e+00> : vector<128x128xf32>
    %30 = tpu.matmul %27, %29, %cst_15 {dimension_numbers = #tpu.dot_dimension_numbers<[1], [0], [0], [1], [0, 0, 1, 1], [], []>} : vector<128x8xf32>, vector<8x128xf32>, vector<128x128xf32> -> vector<128x128xf32>
    %31 = arith.addf %26, %30 : vector<128x128xf32>
    %32 = vector.broadcast %28 : vector<128x1xf32> to vector<128x128xf32>
    %33 = arith.addf %31, %32 : vector<128x128xf32>
    %cst_16 = arith.constant 0.000000e+00 : f32
    %34 = vector.broadcast %cst_16 : f32 to vector<128x128xf32>
    %35 = arith.maximumf %33, %34 : vector<128x128xf32>
    %c0_17 = arith.constant 0 : index
    %c0_18 = arith.constant 0 : index
    %36 = vector.load %arg8[%c0_17, %c0_18] : memref<128x128xbf16, #tpu.memory_space<vmem>>, vector<128x128xbf16>
    %c0_19 = arith.constant 0 : index
    %c0_20 = arith.constant 0 : index
    %37 = vector.load %arg9[%c0_19, %c0_20] : memref<128x1xf32, #tpu.memory_space<vmem>>, vector<128x1xf32>
    %38 = arith.truncf %35 : vector<128x128xf32> to vector<128x128xbf16>
    %cst_21 = arith.constant dense<0.000000e+00> : vector<128x128xf32>
    %39 = tpu.matmul %36, %38, %cst_21 {dimension_numbers = #tpu.dot_dimension_numbers<[1], [0], [0], [1], [0, 0, 1, 1], [], []>} : vector<128x128xbf16>, vector<128x128xbf16>, vector<128x128xf32> -> vector<128x128xf32>
    %40 = vector.broadcast %37 : vector<128x1xf32> to vector<128x128xf32>
    %41 = arith.addf %39, %40 : vector<128x128xf32>
    %cst_22 = arith.constant 0.000000e+00 : f32
    %42 = vector.broadcast %cst_22 : f32 to vector<128x128xf32>
    %43 = arith.maximumf %41, %42 : vector<128x128xf32>
    %c0_23 = arith.constant 0 : index
    %c0_24 = arith.constant 0 : index
    %44 = vector.load %arg10[%c0_23, %c0_24] : memref<8x128xf32, #tpu.memory_space<vmem>>, vector<8x128xf32>
    %c0_25 = arith.constant 0 : index
    %c0_26 = arith.constant 0 : index
    %45 = vector.load %arg11[%c0_25, %c0_26] : memref<8x1xf32, #tpu.memory_space<vmem>>, vector<8x1xf32>
    %cst_27 = arith.constant dense<0.000000e+00> : vector<8x128xf32>
    %46 = tpu.matmul %44, %43, %cst_27 {dimension_numbers = #tpu.dot_dimension_numbers<[1], [0], [0], [1], [0, 0, 1, 1], [], []>} : vector<8x128xf32>, vector<128x128xf32>, vector<8x128xf32> -> vector<8x128xf32>
    %47 = vector.broadcast %45 : vector<8x1xf32> to vector<8x128xf32>
    %48 = arith.addf %46, %47 : vector<8x128xf32>
    %c0_28 = arith.constant 0 : index
    %c0_29 = arith.constant 0 : index
    %49 = vector.load %arg12[%c0_28, %c0_29] : memref<8x128xf32, #tpu.memory_space<vmem>>, vector<8x128xf32>
    tpu.vector_store %arg12[%c0_28, %c0_29], %48 {strides = array<i32>} : memref<8x128xf32, #tpu.memory_space<vmem>>, vector<8x128xf32>,
    return
  }
  func.func @transform_0(%arg0: i32) -> (i32, i32) {
    %c0_i32 = arith.constant 0 : i32
    %c0_i32_0 = arith.constant 0 : i32
    return %c0_i32, %arg0 : i32, i32
  }
  func.func @transform_1(%arg0: i32) -> (i32, i32) {
    %c0_i32 = arith.constant 0 : i32
    %c0_i32_0 = arith.constant 0 : i32
    return %c0_i32, %arg0 : i32, i32
  }
  func.func @transform_2(%arg0: i32) -> (i32, i32) {
    %c0_i32 = arith.constant 0 : i32
    %c0_i32_0 = arith.constant 0 : i32
    %c0_i32_1 = arith.constant 0 : i32
    return %c0_i32, %c0_i32_0 : i32, i32
  }
  func.func @transform_3(%arg0: i32) -> (i32, i32) {
    %c0_i32 = arith.constant 0 : i32
    %c0_i32_0 = arith.constant 0 : i32
    %c0_i32_1 = arith.constant 0 : i32
    return %c0_i32, %c0_i32_0 : i32, i32
  }
  func.func @transform_4(%arg0: i32) -> (i32, i32) {
    %c0_i32 = arith.constant 0 : i32
    %c0_i32_0 = arith.constant 0 : i32
    %c0_i32_1 = arith.constant 0 : i32
    return %c0_i32, %c0_i32_0 : i32, i32
  }
  func.func @transform_5(%arg0: i32) -> (i32, i32) {
    %c0_i32 = arith.constant 0 : i32
    %c0_i32_0 = arith.constant 0 : i32
    %c0_i32_1 = arith.constant 0 : i32
    return %c0_i32, %c0_i32_0 : i32, i32
  }
  func.func @transform_6(%arg0: i32) -> (i32, i32) {
    %c0_i32 = arith.constant 0 : i32
    %c0_i32_0 = arith.constant 0 : i32
    %c0_i32_1 = arith.constant 0 : i32
    return %c0_i32, %c0_i32_0 : i32, i32
  }
  func.func @transform_7(%arg0: i32) -> (i32, i32) {
    %c0_i32 = arith.constant 0 : i32
    %c0_i32_0 = arith.constant 0 : i32
    %c0_i32_1 = arith.constant 0 : i32
    return %c0_i32, %c0_i32_0 : i32, i32
  }
  func.func @transform_8(%arg0: i32) -> (i32, i32) {
    %c0_i32 = arith.constant 0 : i32
    %c0_i32_0 = arith.constant 0 : i32
    %c0_i32_1 = arith.constant 0 : i32
    return %c0_i32, %c0_i32_0 : i32, i32
  }
  func.func @transform_9(%arg0: i32) -> (i32, i32) {
    %c0_i32 = arith.constant 0 : i32
    %c0_i32_0 = arith.constant 0 : i32
    %c0_i32_1 = arith.constant 0 : i32
    return %c0_i32, %c0_i32_0 : i32, i32
  }
  func.func @transform_10(%arg0: i32) -> (i32, i32) {
    %c0_i32 = arith.constant 0 : i32
    %c0_i32_0 = arith.constant 0 : i32
    %c0_i32_1 = arith.constant 0 : i32
    return %c0_i32, %c0_i32_0 : i32, i32
  }
  func.func @transform_11(%arg0: i32) -> (i32, i32) {
    %c0_i32 = arith.constant 0 : i32
    %c0_i32_0 = arith.constant 0 : i32
    return %c0_i32, %arg0 : i32, i32
  }
}

</mosaic_0001>

<llo_original>
// kernel: tpu_custom_call.1
$region0: #{tpu_custom_call.1}
  #allocation0 [shape = 'u32[]', space=smem, size = 0x4, offset = 0x4, fixed_abs, tag = 'smem constant byte address 0x4 - core index']
  #allocation1 [shape = 'u32[144,128]{1,0:T(1,128)}', space=vmem, size = 0x12000, scoped, tag = 'internal scratch']
  %s0 = inlined_call_operand.hbm [shape: s32[3,384], index: 0, kind: input, shape index: {}]
  %s1 = inlined_call_operand.hbm [shape: f32[8,384], index: 1, kind: input, shape index: {}]
  %s2 = inlined_call_operand.hbm [shape: f32[128,16], index: 2, kind: input, shape index: {}]
  %s3 = inlined_call_operand.hbm [shape: f32[128,8], index: 3, kind: input, shape index: {}]
  %s4 = inlined_call_operand.hbm [shape: f32[128,8], index: 4, kind: input, shape index: {}]
  %s5 = inlined_call_operand.hbm [shape: f32[128,8], index: 5, kind: input, shape index: {}]
  %s6 = inlined_call_operand.hbm [shape: f32[128,1], index: 6, kind: input, shape index: {}]
  %s7 = inlined_call_operand.hbm [shape: bf16[128,128], index: 7, kind: input, shape index: {}]
  %s8 = inlined_call_operand.hbm [shape: f32[128,1], index: 8, kind: input, shape index: {}]
  %s9 = inlined_call_operand.hbm [shape: f32[8,128], index: 9, kind: input, shape index: {}]
  %s10 = inlined_call_operand.hbm [shape: f32[8,1], index: 10, kind: input, shape index: {}]
  %s11 = inlined_call_operand.hbm [shape: f32[8,384], index: 11, kind: output, shape index: {}]
  %s12 = sld [smem:[#allocation0]]
  $region121: #{tpu_custom_call.1} parent=0
    _
  %s14 = ssub.s32 1, %s12
  %s15 = scalar_select 0, %s14, %s12
  $region1: #{tpu_custom_call.1} parent=0
    #allocation2 [shape = 'u8[4096]{0}', space=vmem, size = 0x1000, scoped, tag = 'input window, operand 0']
    #allocation3 [shape = 's32[2]{0}', space=sflag, size = 0x8, scoped, tag = 'scoped memory for tpu_custom_call.1']
    #allocation4 [shape = 's32[2]{0}', space=sflag, size = 0x8, scoped, tag = 'scoped memory for tpu_custom_call.1']
    #allocation5 [shape = 'u8[8192]{0}', space=vmem, size = 0x2000, scoped, tag = 'input window, operand 1']
    #allocation6 [shape = 's32[2]{0}', space=sflag, size = 0x8, scoped, tag = 'scoped memory for tpu_custom_call.1']
    #allocation7 [shape = 'u8[65536]{0}', space=vmem, size = 0x10000, scoped, tag = 'input window, operand 2, single buffered']
    #allocation8 [shape = 'u8[65536]{0}', space=vmem, size = 0x10000, scoped, tag = 'input window, operand 3, single buffered']
    #allocation9 [shape = 's32[1]{0}', space=sflag, size = 0x4, scoped, tag = 'scoped memory for tpu_custom_call.1']
    #allocation10 [shape = 'u8[65536]{0}', space=vmem, size = 0x10000, scoped, tag = 'input window, operand 4, single buffered']
    #allocation11 [shape = 'u8[65536]{0}', space=vmem, size = 0x10000, scoped, tag = 'input window, operand 5, single buffered']
    #allocation12 [shape = 's32[1]{0}', space=sflag, size = 0x4, scoped, tag = 'scoped memory for tpu_custom_call.1']
    #allocation13 [shape = 'u8[65536]{0}', space=vmem, size = 0x10000, scoped, tag = 'input window, operand 6, single buffered']
    #allocation14 [shape = 'u8[32768]{0}', space=vmem, size = 0x8000, scoped, tag = 'input window, operand 7, single buffered']
    #allocation15 [shape = 's32[1]{0}', space=sflag, size = 0x4, scoped, tag = 'scoped memory for tpu_custom_call.1']
    #allocation16 [shape = 'u8[65536]{0}', space=vmem, size = 0x10000, scoped, tag = 'input window, operand 8, single buffered']
    #allocation17 [shape = 'u8[4096]{0}', space=vmem, size = 0x1000, scoped, tag = 'input window, operand 9, single buffered']
    #allocation18 [shape = 's32[1]{0}', space=sflag, size = 0x4, scoped, tag = 'scoped memory for tpu_custom_call.1']
    #allocation19 [shape = 'u8[4096]{0}', space=vmem, size = 0x1000, scoped, tag = 'input window, operand 10, single buffered']
    #allocation20 [shape = 'u8[8192]{0}', space=vmem, size = 0x2000, scoped, tag = 'output window, operand 0']
    %16 = vsyncpa [#allocation3], 0
    %s17 = scalar_lea.sflag [#allocation3], 1
    %18 = vsyncpa %s17, 0
    %19 = vsyncpa [#allocation6], 0
    %s20 = scalar_lea.sflag [#allocation6], 1
    %21 = vsyncpa %s20, 0
    %22 = vsyncpa [#allocation9], 0
    %23 = vsyncpa [#allocation12], 0
    %24 = vsyncpa [#allocation15], 0
    %25 = vsyncpa [#allocation18], 0
    %26 = vsyncpa [#allocation4], 0
    %s27 = scalar_lea.sflag [#allocation4], 1
    %28 = vsyncpa %s27, 0
    loop: start=0, step=1, limit=5
    $region2: #{tpu_custom_call.1} parent=1 // loop_pre_header
      _
    $region3: #{tpu_custom_call.1} parent=1 // loop_header
      %s30 = sphi 0, %s34
      %p31 = scmp.ge.s32.totalorder %s30, 5
      %s40 = sphi 0, %s42
      %s43 = sphi 0, %s40
      %s44 = sphi 0, %s43
      %s60 = sphi 0, %s44
      %s66 = sphi 0, %s68
      %s69 = sphi 0, %s66
      %s70 = sphi 0, %s69
      %s86 = sphi 0, %s70
      %s90 = sphi 0, %s90
      %s92 = sphi 0, %s90
      %s93 = sphi 0, %s92
      %s107 = sphi 0, %s93
      %s111 = sphi 0, %s111
      %s113 = sphi 0, %s111
      %s114 = sphi 0, %s113
      %s128 = sphi 0, %s114
      %s132 = sphi 0, %s132
      %s134 = sphi 0, %s132
      %s135 = sphi 0, %s134
      %s149 = sphi 0, %s135
      %s153 = sphi 0, %s153
      %s155 = sphi 0, %s153
      %s156 = sphi 0, %s155
      %s170 = sphi 0, %s156
      %s174 = sphi 0, %s174
      %s176 = sphi 0, %s174
      %s177 = sphi 0, %s176
      %s191 = sphi 0, %s177
      %s195 = sphi 0, %s195
      %s197 = sphi 0, %s195
      %s198 = sphi 0, %s197
      %s212 = sphi 0, %s198
      %s216 = sphi 0, %s216
      %s218 = sphi 0, %s216
      %s219 = sphi 0, %s218
      %s233 = sphi 0, %s219
      %s237 = sphi 0, %s237
      %s239 = sphi 0, %s237
      %s240 = sphi 0, %s239
      %s254 = sphi 0, %s240
      %s258 = sphi 0, %s258
      %s260 = sphi 0, %s258
      %s261 = sphi 0, %s260
      %s275 = sphi 0, %s261
      %s281 = sphi 0, %s283
      %s284 = sphi 0, %s281
      %s285 = sphi 0, %s284
      %s301 = sphi 0, %s285
    $region4: #{tpu_custom_call.1} parent=1 // loop_header_branch
      %33 = sbr.rel (%p31) target = $region8
    $region5: #{tpu_custom_call.1} parent=1 // loop_body
      %s35 = ssub.s32 %s30, 1
      %s36 = ssub.s32 %s30, 2
      %s37 = sadd.s32 %s30, 1
      %s38 = ssub.s32 %s30, %s37
      %p39 = scmp.eq.s32.totalorder %s38, 0
      %s41 = sadd.s32 %s40, 1
      %s42 = scalar_select %p39, %s40, %s41
      %p45 = pneg %p39
      %p46 = scmp.eq.s32.totalorder %s30, 2
      %p47 = por %p45, %p46
      %p48 = scmp.ne.s32.totalorder %s40, %s43
      %p49 = scmp.eq.s32.totalorder %s30, 0
      %p50 = por %p48, %p49
      %p51 = scmp.ne.s32.totalorder %s40, %s43
      %p52 = scmp.eq.s32.totalorder %s35, 2
      %p53 = por %p51, %p52
      %p54 = scmp.ne.s32.totalorder %s43, %s44
      %p55 = scmp.eq.s32.totalorder %s35, 0
      %p56 = por %p54, %p55
      %p57 = scmp.ne.s32.totalorder %s43, %s44
      %p58 = scmp.eq.s32.totalorder %s36, 2
      %p59 = por %p57, %p58
      %p61 = scmp.ne.s32.totalorder %s44, %s60
      %p62 = scmp.eq.s32.totalorder %s36, 0
      %p63 = por %p61, %p62
      %s64 = ssub.s32 %s30, %s37
      %p65 = scmp.eq.s32.totalorder %s64, 0
      %s67 = sadd.s32 %s66, 1
      %s68 = scalar_select %p65, %s66, %s67
      %p71 = pneg %p65
      %p72 = scmp.eq.s32.totalorder %s30, 2
      %p73 = por %p71, %p72
      %p74 = scmp.ne.s32.totalorder %s66, %s69
      %p75 = scmp.eq.s32.totalorder %s30, 0
      %p76 = por %p74, %p75
      %p77 = scmp.ne.s32.totalorder %s66, %s69
      %p78 = scmp.eq.s32.totalorder %s35, 2
      %p79 = por %p77, %p78
      %p80 = scmp.ne.s32.totalorder %s69, %s70
      %p81 = scmp.eq.s32.totalorder %s35, 0
      %p82 = por %p80, %p81
      %p83 = scmp.ne.s32.totalorder %s69, %s70
      %p84 = scmp.eq.s32.totalorder %s36, 2
      %p85 = por %p83, %p84
      %p87 = scmp.ne.s32.totalorder %s70, %s86
      %p88 = scmp.eq.s32.totalorder %s36, 0
      %p89 = por %p87, %p88
      %s91 = sadd.s32 %s90, 1
      %p94 = scmp.eq.s32.totalorder %s30, 2
      %p95 = scmp.ne.s32.totalorder %s90, %s92
      %p96 = scmp.eq.s32.totalorder %s30, 0
      %p97 = por %p95, %p96
      %p98 = scmp.ne.s32.totalorder %s90, %s92
      %p99 = scmp.eq.s32.totalorder %s35, 2
      %p100 = por %p98, %p99
      %p101 = scmp.ne.s32.totalorder %s92, %s93
      %p102 = scmp.eq.s32.totalorder %s35, 0
      %p103 = por %p101, %p102
      %p104 = scmp.ne.s32.totalorder %s92, %s93
      %p105 = scmp.eq.s32.totalorder %s36, 2
      %p106 = por %p104, %p105
      %p108 = scmp.ne.s32.totalorder %s93, %s107
      %p109 = scmp.eq.s32.totalorder %s36, 0
      %p110 = por %p108, %p109
      %s112 = sadd.s32 %s111, 1
      %p115 = scmp.eq.s32.totalorder %s30, 2
      %p116 = scmp.ne.s32.totalorder %s111, %s113
      %p117 = scmp.eq.s32.totalorder %s30, 0
      %p118 = por %p116, %p117
      %p119 = scmp.ne.s32.totalorder %s111, %s113
      %p120 = scmp.eq.s32.totalorder %s35, 2
      %p121 = por %p119, %p120
      %p122 = scmp.ne.s32.totalorder %s113, %s114
      %p123 = scmp.eq.s32.totalorder %s35, 0
      %p124 = por %p122, %p123
      %p125 = scmp.ne.s32.totalorder %s113, %s114
      %p126 = scmp.eq.s32.totalorder %s36, 2
      %p127 = por %p125, %p126
      %p129 = scmp.ne.s32.totalorder %s114, %s128
      %p130 = scmp.eq.s32.totalorder %s36, 0
      %p131 = por %p129, %p130
      %s133 = sadd.s32 %s132, 1
      %p136 = scmp.eq.s32.totalorder %s30, 2
      %p137 = scmp.ne.s32.totalorder %s132, %s134
      %p138 = scmp.eq.s32.totalorder %s30, 0
      %p139 = por %p137, %p138
      %p140 = scmp.ne.s32.totalorder %s132, %s134
      %p141 = scmp.eq.s32.totalorder %s35, 2
      %p142 = por %p140, %p141
      %p143 = scmp.ne.s32.totalorder %s134, %s135
      %p144 = scmp.eq.s32.totalorder %s35, 0
      %p145 = por %p143, %p144
      %p146 = scmp.ne.s32.totalorder %s134, %s135
      %p147 = scmp.eq.s32.totalorder %s36, 2
      %p148 = por %p146, %p147
      %p150 = scmp.ne.s32.totalorder %s135, %s149
      %p151 = scmp.eq.s32.totalorder %s36, 0
      %p152 = por %p150, %p151
      %s154 = sadd.s32 %s153, 1
      %p157 = scmp.eq.s32.totalorder %s30, 2
      %p158 = scmp.ne.s32.totalorder %s153, %s155
      %p159 = scmp.eq.s32.totalorder %s30, 0
      %p160 = por %p158, %p159
      %p161 = scmp.ne.s32.totalorder %s153, %s155
      %p162 = scmp.eq.s32.totalorder %s35, 2
      %p163 = por %p161, %p162
      %p164 = scmp.ne.s32.totalorder %s155, %s156
      %p165 = scmp.eq.s32.totalorder %s35, 0
      %p166 = por %p164, %p165
      %p167 = scmp.ne.s32.totalorder %s155, %s156
      %p168 = scmp.eq.s32.totalorder %s36, 2
      %p169 = por %p167, %p168
      %p171 = scmp.ne.s32.totalorder %s156, %s170
      %p172 = scmp.eq.s32.totalorder %s36, 0
      %p173 = por %p171, %p172
      %s175 = sadd.s32 %s174, 1
      %p178 = scmp.eq.s32.totalorder %s30, 2
      %p179 = scmp.ne.s32.totalorder %s174, %s176
      %p180 = scmp.eq.s32.totalorder %s30, 0
      %p181 = por %p179, %p180
      %p182 = scmp.ne.s32.totalorder %s174, %s176
      %p183 = scmp.eq.s32.totalorder %s35, 2
      %p184 = por %p182, %p183
      %p185 = scmp.ne.s32.totalorder %s176, %s177
      %p186 = scmp.eq.s32.totalorder %s35, 0
      %p187 = por %p185, %p186
      %p188 = scmp.ne.s32.totalorder %s176, %s177
      %p189 = scmp.eq.s32.totalorder %s36, 2
      %p190 = por %p188, %p189
      %p192 = scmp.ne.s32.totalorder %s177, %s191
      %p193 = scmp.eq.s32.totalorder %s36, 0
      %p194 = por %p192, %p193
      %s196 = sadd.s32 %s195, 1
      %p199 = scmp.eq.s32.totalorder %s30, 2
      %p200 = scmp.ne.s32.totalorder %s195, %s197
      %p201 = scmp.eq.s32.totalorder %s30, 0
      %p202 = por %p200, %p201
      %p203 = scmp.ne.s32.totalorder %s195, %s197
      %p204 = scmp.eq.s32.totalorder %s35, 2
      %p205 = por %p203, %p204
      %p206 = scmp.ne.s32.totalorder %s197, %s198
      %p207 = scmp.eq.s32.totalorder %s35, 0
      %p208 = por %p206, %p207
      %p209 = scmp.ne.s32.totalorder %s197, %s198
      %p210 = scmp.eq.s32.totalorder %s36, 2
      %p211 = por %p209, %p210
      %p213 = scmp.ne.s32.totalorder %s198, %s212
      %p214 = scmp.eq.s32.totalorder %s36, 0
      %p215 = por %p213, %p214
      %s217 = sadd.s32 %s216, 1
      %p220 = scmp.eq.s32.totalorder %s30, 2
      %p221 = scmp.ne.s32.totalorder %s216, %s218
      %p222 = scmp.eq.s32.totalorder %s30, 0
      %p223 = por %p221, %p222
      %p224 = scmp.ne.s32.totalorder %s216, %s218
      %p225 = scmp.eq.s32.totalorder %s35, 2
      %p226 = por %p224, %p225
      %p227 = scmp.ne.s32.totalorder %s218, %s219
      %p228 = scmp.eq.s32.totalorder %s35, 0
      %p229 = por %p227, %p228
      %p230 = scmp.ne.s32.totalorder %s218, %s219
      %p231 = scmp.eq.s32.totalorder %s36, 2
      %p232 = por %p230, %p231
      %p234 = scmp.ne.s32.totalorder %s219, %s233
      %p235 = scmp.eq.s32.totalorder %s36, 0
      %p236 = por %p234, %p235
      %s238 = sadd.s32 %s237, 1
      %p241 = scmp.eq.s32.totalorder %s30, 2
      %p242 = scmp.ne.s32.totalorder %s237, %s239
      %p243 = scmp.eq.s32.totalorder %s30, 0
      %p244 = por %p242, %p243
      %p245 = scmp.ne.s32.totalorder %s237, %s239
      %p246 = scmp.eq.s32.totalorder %s35, 2
      %p247 = por %p245, %p246
      %p248 = scmp.ne.s32.totalorder %s239, %s240
      %p249 = scmp.eq.s32.totalorder %s35, 0
      %p250 = por %p248, %p249
      %p251 = scmp.ne.s32.totalorder %s239, %s240
      %p252 = scmp.eq.s32.totalorder %s36, 2
      %p253 = por %p251, %p252
      %p255 = scmp.ne.s32.totalorder %s240, %s254
      %p256 = scmp.eq.s32.totalorder %s36, 0
      %p257 = por %p255, %p256
      %s259 = sadd.s32 %s258, 1
      %p262 = scmp.eq.s32.totalorder %s30, 2
      %p263 = scmp.ne.s32.totalorder %s258, %s260
      %p264 = scmp.eq.s32.totalorder %s30, 0
      %p265 = por %p263, %p264
      %p266 = scmp.ne.s32.totalorder %s258, %s260
      %p267 = scmp.eq.s32.totalorder %s35, 2
      %p268 = por %p266, %p267
      %p269 = scmp.ne.s32.totalorder %s260, %s261
      %p270 = scmp.eq.s32.totalorder %s35, 0
      %p271 = por %p269, %p270
      %p272 = scmp.ne.s32.totalorder %s260, %s261
      %p273 = scmp.eq.s32.totalorder %s36, 2
      %p274 = por %p272, %p273
      %p276 = scmp.ne.s32.totalorder %s261, %s275
      %p277 = scmp.eq.s32.totalorder %s36, 0
      %p278 = por %p276, %p277
      %s279 = ssub.s32 %s30, %s37
      %p280 = scmp.eq.s32.totalorder %s279, 0
      %s282 = sadd.s32 %s281, 1
      %s283 = scalar_select %p280, %s281, %s282
      %p286 = pneg %p280
      %p287 = scmp.eq.s32.totalorder %s30, 2
      %p288 = por %p286, %p287
      %p289 = scmp.ne.s32.totalorder %s281, %s284
      %p290 = scmp.eq.s32.totalorder %s30, 0
      %p291 = por %p289, %p290
      %p292 = scmp.ne.s32.totalorder %s281, %s284
      %p293 = scmp.eq.s32.totalorder %s35, 2
      %p294 = por %p292, %p293
      %p295 = scmp.ne.s32.totalorder %s284, %s285
      %p296 = scmp.eq.s32.totalorder %s35, 0
      %p297 = por %p295, %p296
      %p298 = scmp.ne.s32.totalorder %s284, %s285
      %p299 = scmp.eq.s32.totalorder %s36, 2
      %p300 = por %p298, %p299
      %p302 = scmp.ne.s32.totalorder %s285, %s301
      %p303 = scmp.eq.s32.totalorder %s36, 0
      %p304 = por %p302, %p303
      %p305 = scmp.le.s32.totalorder 1, %s30
      %p306 = scmp.lt.s32.totalorder %s30, 4
      %p307 = pnand %p305, %p306
      %p308 = pneg %p307
      // Predicated region
      $region9: #{tpu_custom_call.1} parent=5 // pred_check
        _
      $region10: #{tpu_custom_call.1} parent=5 // pred_check_branch
        %310 = sbr.rel (%p307) target = $region12
      $region11: #{tpu_custom_call.1} parent=5 // pred_region
        %s311 = ssub.s32 %s30, 1
        // Predicated region
        $region13: #{tpu_custom_call.1} parent=11 // pred_check
          %p312 = pneg %p103
        $region14: #{tpu_custom_call.1} parent=11 // pred_check_branch
          %314 = sbr.rel (%p312) target = $region16
        $region15: #{tpu_custom_call.1} parent=11 // pred_region
          %s316 = ssub.s32 2048, 2048
          %317 = vsyncadd [#allocation6], %s316
          %s318 = sshll.u32 [#allocation7], 4
          %s319 = int_to_ptr.vmem [resolvable:$true] %s318
          %324 = dma.hbm_to_vmem [thread:$0]  %s2, 2048, %s319, [#allocation6], 128, 128, 8
        $region16: #{tpu_custom_call.1} parent=11 // pred_fallthru
          _
        // Predicated region
        $region17: #{tpu_custom_call.1} parent=11 // pred_check
          %p325 = pneg %p124
        $region18: #{tpu_custom_call.1} parent=11 // pred_check_branch
          %327 = sbr.rel (%p325) target = $region20
        $region19: #{tpu_custom_call.1} parent=11 // pred_region
          %s329 = ssub.s32 2048, 2048
          %330 = vsyncadd [#allocation9], %s329
          %s331 = sshll.u32 [#allocation8], 4
          %s332 = int_to_ptr.vmem [resolvable:$true] %s331
          %337 = dma.hbm_to_vmem [thread:$0]  %s3, 2048, %s332, [#allocation9], 128, 128, 8
        $region20: #{tpu_custom_call.1} parent=11 // pred_fallthru
          _
        // Predicated region
        $region21: #{tpu_custom_call.1} parent=11 // pred_check
          %p338 = pneg %p145
        $region22: #{tpu_custom_call.1} parent=11 // pred_check_branch
          %340 = sbr.rel (%p338) target = $region24
        $region23: #{tpu_custom_call.1} parent=11 // pred_region
          %s342 = ssub.s32 2048, 2048
          %343 = vsyncadd [#allocation9], %s342
          %s344 = sshll.u32 [#allocation10], 4
          %s345 = int_to_ptr.vmem [resolvable:$true] %s344
          %350 = dma.hbm_to_vmem [thread:$0]  %s4, 2048, %s345, [#allocation9], 128, 128, 8
        $region24: #{tpu_custom_call.1} parent=11 // pred_fallthru
          _
        // Predicated region
        $region25: #{tpu_custom_call.1} parent=11 // pred_check
          %p351 = pneg %p166
        $region26: #{tpu_custom_call.1} parent=11 // pred_check_branch
          %353 = sbr.rel (%p351) target = $region28
        $region27: #{tpu_custom_call.1} parent=11 // pred_region
          %s355 = ssub.s32 2048, 2048
          %356 = vsyncadd [#allocation12], %s355
          %s357 = sshll.u32 [#allocation11], 4
          %s358 = int_to_ptr.vmem [resolvable:$true] %s357
          %363 = dma.hbm_to_vmem [thread:$0]  %s5, 2048, %s358, [#allocation12], 128, 128, 8
        $region28: #{tpu_custom_call.1} parent=11 // pred_fallthru
          _
        // Predicated region
        $region29: #{tpu_custom_call.1} parent=11 // pred_check
          %p364 = pneg %p187
        $region30: #{tpu_custom_call.1} parent=11 // pred_check_branch
          %366 = sbr.rel (%p364) target = $region32
        $region31: #{tpu_custom_call.1} parent=11 // pred_region
          %s368 = ssub.s32 2048, 2048
          %369 = vsyncadd [#allocation12], %s368
          %s370 = sshll.u32 [#allocation13], 4
          %s371 = int_to_ptr.vmem [resolvable:$true] %s370
          %376 = dma.hbm_to_vmem [thread:$0]  %s6, 2048, %s371, [#allocation12], 128, 128, 8
        $region32: #{tpu_custom_call.1} parent=11 // pred_fallthru
          _
        // Predicated region
        $region33: #{tpu_custom_call.1} parent=11 // pred_check
          %p377 = pneg %p208
        $region34: #{tpu_custom_call.1} parent=11 // pred_check_branch
          %379 = sbr.rel (%p377) target = $region36
        $region35: #{tpu_custom_call.1} parent=11 // pred_region
          %s381 = ssub.s32 1024, 1024
          %382 = vsyncadd [#allocation15], %s381
          %s383 = sshll.u32 [#allocation14], 4
          %s384 = int_to_ptr.vmem [resolvable:$true] %s383
          %389 = dma.hbm_to_vmem [thread:$0]  %s7, 1024, %s384, [#allocation15], 64, 64, 4
        $region36: #{tpu_custom_call.1} parent=11 // pred_fallthru
          _
        // Predicated region
        $region37: #{tpu_custom_call.1} parent=11 // pred_check
          %p390 = pneg %p229
        $region38: #{tpu_custom_call.1} parent=11 // pred_check_branch
          %392 = sbr.rel (%p390) target = $region40
        $region39: #{tpu_custom_call.1} parent=11 // pred_region
          %s394 = ssub.s32 2048, 2048
          %395 = vsyncadd [#allocation15], %s394
          %s396 = sshll.u32 [#allocation16], 4
          %s397 = int_to_ptr.vmem [resolvable:$true] %s396
          %402 = dma.hbm_to_vmem [thread:$0]  %s8, 2048, %s397, [#allocation15], 128, 128, 8
        $region40: #{tpu_custom_call.1} parent=11 // pred_fallthru
          _
        // Predicated region
        $region41: #{tpu_custom_call.1} parent=11 // pred_check
          %p403 = pneg %p250
        $region42: #{tpu_custom_call.1} parent=11 // pred_check_branch
          %405 = sbr.rel (%p403) target = $region44
        $region43: #{tpu_custom_call.1} parent=11 // pred_region
          %s407 = ssub.s32 128, 128
          %408 = vsyncadd [#allocation18], %s407
          %s410 = sshll.u32 [#allocation17], 4
          %s411 = int_to_ptr.vmem [resolvable:$true] %s410
          %413 = dma.hbm_to_vmem [thread:$0]  %s9, 128, %s411, [#allocation18]
        $region44: #{tpu_custom_call.1} parent=11 // pred_fallthru
          _
        // Predicated region
        $region45: #{tpu_custom_call.1} parent=11 // pred_check
          %p414 = pneg %p271
        $region46: #{tpu_custom_call.1} parent=11 // pred_check_branch
          %416 = sbr.rel (%p414) target = $region48
        $region47: #{tpu_custom_call.1} parent=11 // pred_region
          %s418 = ssub.s32 128, 128
          %419 = vsyncadd [#allocation18], %s418
          %s421 = sshll.u32 [#allocation19], 4
          %s422 = int_to_ptr.vmem [resolvable:$true] %s421
          %424 = dma.hbm_to_vmem [thread:$0]  %s10, 128, %s422, [#allocation18]
        $region48: #{tpu_custom_call.1} parent=11 // pred_fallthru
          _
      $region12: #{tpu_custom_call.1} parent=5 // pred_fallthru
        _
      %p425 = scmp.lt.s32.totalorder %s30, 3
      // Predicated region
      $region49: #{tpu_custom_call.1} parent=5 // pred_check
        %p426 = pneg %p425
      $region50: #{tpu_custom_call.1} parent=5 // pred_check_branch
        %428 = sbr.rel (%p426) target = $region52
      $region51: #{tpu_custom_call.1} parent=5 // pred_region
        // Predicated region
        $region53: #{tpu_custom_call.1} parent=51 // pred_check
          %p429 = pneg %p50
        $region54: #{tpu_custom_call.1} parent=51 // pred_check_branch
          %431 = sbr.rel (%p429) target = $region56
        $region55: #{tpu_custom_call.1} parent=51 // pred_region
          %s432 = sand.u32 %s40, 1
          %s433 = scalar_lea.sflag [#allocation3], %s432
          %s434 = sand.u32 %s40, 1
          %s435 = smul.addr %s434, 4
          %s436 = scalar_lea.vmem [#allocation2], %s435
          %s438 = ssub.s32 64, 64
          %439 = vsyncadd %s433, %s438
          %s440 = smul.addr %s30, 64
          %s441 = scalar_lea.hbm %s0, %s440
          %s443 = sshll.u32 %s436, 4
          %s444 = int_to_ptr.vmem [resolvable:$true] %s443
          %446 = dma.hbm_to_vmem [thread:$0]  %s441, 64, %s444, %s433
        $region56: #{tpu_custom_call.1} parent=51 // pred_fallthru
          _
        // Predicated region
        $region57: #{tpu_custom_call.1} parent=51 // pred_check
          %p447 = pneg %p76
        $region58: #{tpu_custom_call.1} parent=51 // pred_check_branch
          %449 = sbr.rel (%p447) target = $region60
        $region59: #{tpu_custom_call.1} parent=51 // pred_region
          %s450 = sand.u32 %s30, 1
          %s451 = scalar_lea.sflag [#allocation6], %s450
          %s452 = sand.u32 %s66, 1
          %s453 = smul.addr %s452, 8
          %s454 = scalar_lea.vmem [#allocation5], %s453
          %s456 = ssub.s32 128, 128
          %457 = vsyncadd %s451, %s456
          %s458 = smul.addr %s30, 128
          %s459 = scalar_lea.hbm %s1, %s458
          %s461 = sshll.u32 %s454, 4
          %s462 = int_to_ptr.vmem [resolvable:$true] %s461
          %464 = dma.hbm_to_vmem [thread:$0]  %s459, 128, %s462, %s451
        $region60: #{tpu_custom_call.1} parent=51 // pred_fallthru
          _
      $region52: #{tpu_custom_call.1} parent=5 // pred_fallthru
        _
      %p465 = scmp.le.s32.totalorder 1, %s30
      %p466 = scmp.lt.s32.totalorder %s30, 4
      %p467 = pnand %p465, %p466
      %p468 = pneg %p467
      // Predicated region
      $region61: #{tpu_custom_call.1} parent=5 // pred_check
        _
      $region62: #{tpu_custom_call.1} parent=5 // pred_check_branch
        %470 = sbr.rel (%p467) target = $region64
      $region63: #{tpu_custom_call.1} parent=5 // pred_region
        %s471 = ssub.s32 %s30, 1
        %s472 = sand.u32 %s43, 1
        %s473 = scalar_lea.sflag [#allocation3], %s472
        %s474 = sand.u32 %s43, 1
        %s475 = smul.addr %s474, 4
        %s476 = scalar_lea.vmem [#allocation2], %s475
        // Predicated region
        $region65: #{tpu_custom_call.1} parent=63 // pred_check
          %p477 = pneg %p56
        $region66: #{tpu_custom_call.1} parent=63 // pred_check_branch
          %479 = sbr.rel (%p477) target = $region68
        $region67: #{tpu_custom_call.1} parent=63 // pred_region
          %480 = dma.done %s473, 64
        $region68: #{tpu_custom_call.1} parent=63 // pred_fallthru
          _
        %s481 = sand.u32 %s35, 1
        %s482 = scalar_lea.sflag [#allocation6], %s481
        %s483 = sand.u32 %s69, 1
        %s484 = smul.addr %s483, 8
        %s485 = scalar_lea.vmem [#allocation5], %s484
        // Predicated region
        $region69: #{tpu_custom_call.1} parent=63 // pred_check
          %p486 = pneg %p82
        $region70: #{tpu_custom_call.1} parent=63 // pred_check_branch
          %488 = sbr.rel (%p486) target = $region72
        $region71: #{tpu_custom_call.1} parent=63 // pred_region
          %489 = dma.done %s482, 128
        $region72: #{tpu_custom_call.1} parent=63 // pred_fallthru
          _
        // Predicated region
        $region73: #{tpu_custom_call.1} parent=63 // pred_check
          %p490 = pneg %p103
        $region74: #{tpu_custom_call.1} parent=63 // pred_check_branch
          %492 = sbr.rel (%p490) target = $region76
        $region75: #{tpu_custom_call.1} parent=63 // pred_region
          %493 = dma.done [#allocation6], 2048
        $region76: #{tpu_custom_call.1} parent=63 // pred_fallthru
          _
        // Predicated region
        $region77: #{tpu_custom_call.1} parent=63 // pred_check
          %p494 = pneg %p124
        $region78: #{tpu_custom_call.1} parent=63 // pred_check_branch
          %496 = sbr.rel (%p494) target = $region80
        $region79: #{tpu_custom_call.1} parent=63 // pred_region
          %497 = dma.done [#allocation9], 2048
        $region80: #{tpu_custom_call.1} parent=63 // pred_fallthru
          _
        // Predicated region
        $region81: #{tpu_custom_call.1} parent=63 // pred_check
          %p498 = pneg %p145
        $region82: #{tpu_custom_call.1} parent=63 // pred_check_branch
          %500 = sbr.rel (%p498) target = $region84
        $region83: #{tpu_custom_call.1} parent=63 // pred_region
          %501 = dma.done [#allocation9], 2048
        $region84: #{tpu_custom_call.1} parent=63 // pred_fallthru
          _
        // Predicated region
        $region85: #{tpu_custom_call.1} parent=63 // pred_check
          %p502 = pneg %p166
        $region86: #{tpu_custom_call.1} parent=63 // pred_check_branch
          %504 = sbr.rel (%p502) target = $region88
        $region87: #{tpu_custom_call.1} parent=63 // pred_region
          %505 = dma.done [#allocation12], 2048
        $region88: #{tpu_custom_call.1} parent=63 // pred_fallthru
          _
        // Predicated region
        $region89: #{tpu_custom_call.1} parent=63 // pred_check
          %p506 = pneg %p187
        $region90: #{tpu_custom_call.1} parent=63 // pred_check_branch
          %508 = sbr.rel (%p506) target = $region92
        $region91: #{tpu_custom_call.1} parent=63 // pred_region
          %509 = dma.done [#allocation12], 2048
        $region92: #{tpu_custom_call.1} parent=63 // pred_fallthru
          _
        // Predicated region
        $region93: #{tpu_custom_call.1} parent=63 // pred_check
          %p510 = pneg %p208
        $region94: #{tpu_custom_call.1} parent=63 // pred_check_branch
          %512 = sbr.rel (%p510) target = $region96
        $region95: #{tpu_custom_call.1} parent=63 // pred_region
          %513 = dma.done [#allocation15], 1024
        $region96: #{tpu_custom_call.1} parent=63 // pred_fallthru
          _
        // Predicated region
        $region97: #{tpu_custom_call.1} parent=63 // pred_check
          %p514 = pneg %p229
        $region98: #{tpu_custom_call.1} parent=63 // pred_check_branch
          %516 = sbr.rel (%p514) target = $region100
        $region99: #{tpu_custom_call.1} parent=63 // pred_region
          %517 = dma.done [#allocation15], 2048
        $region100: #{tpu_custom_call.1} parent=63 // pred_fallthru
          _
        // Predicated region
        $region101: #{tpu_custom_call.1} parent=63 // pred_check
          %p518 = pneg %p250
        $region102: #{tpu_custom_call.1} parent=63 // pred_check_branch
          %520 = sbr.rel (%p518) target = $region104
        $region103: #{tpu_custom_call.1} parent=63 // pred_region
          %521 = dma.done [#allocation18], 128
        $region104: #{tpu_custom_call.1} parent=63 // pred_fallthru
          _
        // Predicated region
        $region105: #{tpu_custom_call.1} parent=63 // pred_check
          %p522 = pneg %p271
        $region106: #{tpu_custom_call.1} parent=63 // pred_check_branch
          %524 = sbr.rel (%p522) target = $region108
        $region107: #{tpu_custom_call.1} parent=63 // pred_region
          %525 = dma.done [#allocation18], 128
        $region108: #{tpu_custom_call.1} parent=63 // pred_fallthru
          _
        %s526 = sand.u32 %s43, 1
        %s527 = scalar_lea.sflag [#allocation3], %s526
        %s528 = sand.u32 %s43, 1
        %s529 = smul.addr %s528, 4
        %s530 = scalar_lea.vmem [#allocation2], %s529
        %p531 = pneg %p56
        %p532 = pneg %p53
        %s533 = sand.u32 %s35, 1
        %s534 = scalar_lea.sflag [#allocation6], %s533
        %s535 = sand.u32 %s69, 1
        %s536 = smul.addr %s535, 8
        %s537 = scalar_lea.vmem [#allocation5], %s536
        %p538 = pneg %p82
        %p539 = pneg %p79
        %p540 = pneg %p103
        %p541 = pneg %p100
        %p542 = pneg %p124
        %p543 = pneg %p121
        %p544 = pneg %p145
        %p545 = pneg %p142
        %p546 = pneg %p166
        %p547 = pneg %p163
        %p548 = pneg %p187
        %p549 = pneg %p184
        %p550 = pneg %p208
        %p551 = pneg %p205
        %p552 = pneg %p229
        %p553 = pneg %p226
        %p554 = pneg %p250
        %p555 = pneg %p247
        %p556 = pneg %p271
        %p557 = pneg %p268
        %p558 = pneg %p297
        %p559 = pneg %p294
        %s560 = sand.u32 %s284, 1
        %s561 = scalar_lea.sflag [#allocation4], %s560
        %s562 = sand.u32 %s284, 1
        %s563 = smul.addr %s562, 8
        %s564 = scalar_lea.vmem [#allocation20], %s563
        %v566 = vld [vmem:[%s476] sm:$0x7]
        %v567 = vld [vmem:[#allocation7] sm:$0xff]
        %v568 = vld [vmem:[#allocation7 + $0x8] sm:$0xff]
        %v569 = vld [vmem:[#allocation7 + $0x10] sm:$0xff]
        %v570 = vld [vmem:[#allocation7 + $0x18] sm:$0xff]
        %v571 = vld [vmem:[#allocation7 + $0x20] sm:$0xff]
        %v572 = vld [vmem:[#allocation7 + $0x28] sm:$0xff]
        %v573 = vld [vmem:[#allocation7 + $0x30] sm:$0xff]
        %v574 = vld [vmem:[#allocation7 + $0x38] sm:$0xff]
        %v575 = vld [vmem:[#allocation7 + $0x40] sm:$0xff]
        %v576 = vld [vmem:[#allocation7 + $0x48] sm:$0xff]
        %v577 = vld [vmem:[#allocation7 + $0x50] sm:$0xff]
        %v578 = vld [vmem:[#allocation7 + $0x58] sm:$0xff]
        %v579 = vld [vmem:[#allocation7 + $0x60] sm:$0xff]
        %v580 = vld [vmem:[#allocation7 + $0x68] sm:$0xff]
        %v581 = vld [vmem:[#allocation7 + $0x70] sm:$0xff]
        %v582 = vld [vmem:[#allocation7 + $0x78] sm:$0xff]
        %v583 = vlaneseq
        %v584 = vshrl.u32 %v583, 7
        %v585 = vadd.s32 %v584, 8
        %v586 = vlaneseq
        %v587 = vshrl.u32 %v586, 7
        %v588 = vsub.s32 0, %v587
        %v589 = vrot.slane %v566, %v588
        %vm590 = vcmp.eq.s32.totalorder %v584, %v589
        %vm591 = vcmp.eq.s32.totalorder %v585, %v589
        %v592 = vsel %vm590, 1, 0
        %v593 = vsel %vm591, 1, 0
        %v594 = vcvt.s32.f32 %v592
        %v595 = vcvt.s32.f32 %v593
        %v596 = vld [vmem:[#allocation8] sm:$0xff]
        %v597 = vld [vmem:[#allocation8 + $0x8] sm:$0xff]
        %v598 = vld [vmem:[#allocation8 + $0x10] sm:$0xff]
        %v599 = vld [vmem:[#allocation8 + $0x18] sm:$0xff]
        %v600 = vld [vmem:[#allocation8 + $0x20] sm:$0xff]
        %v601 = vld [vmem:[#allocation8 + $0x28] sm:$0xff]
        %v602 = vld [vmem:[#allocation8 + $0x30] sm:$0xff]
        %v603 = vld [vmem:[#allocation8 + $0x38] sm:$0xff]
        %v604 = vld [vmem:[#allocation8 + $0x40] sm:$0xff]
        %v605 = vld [vmem:[#allocation8 + $0x48] sm:$0xff]
        %v606 = vld [vmem:[#allocation8 + $0x50] sm:$0xff]
        %v607 = vld [vmem:[#allocation8 + $0x58] sm:$0xff]
        %v608 = vld [vmem:[#allocation8 + $0x60] sm:$0xff]
        %v609 = vld [vmem:[#allocation8 + $0x68] sm:$0xff]
        %v610 = vld [vmem:[#allocation8 + $0x70] sm:$0xff]
        %v611 = vld [vmem:[#allocation8 + $0x78] sm:$0xff]
        %v612 = vlaneseq
        %v613 = vshrl.u32 %v612, 7
        %v614 = vsub.s32 1, %v613
        %v615 = vrot.slane %v566, %v614
        %vm616 = vcmp.eq.s32.totalorder %v584, %v615
        %v617 = vsel %vm616, 1, 0
        %v618 = vcvt.s32.f32 %v617
        %vm619 = vcmask 64512
        %v621 = vsel %vm619, %v596, 0
        %v624 = vsel %vm619, %v597, 0
        %v627 = vsel %vm619, %v598, 0
        %v630 = vsel %vm619, %v599, 0
        %v633 = vsel %vm619, %v600, 0
        %v636 = vsel %vm619, %v601, 0
        %v639 = vsel %vm619, %v602, 0
        %v642 = vsel %vm619, %v603, 0
        %v645 = vsel %vm619, %v604, 0
        %v648 = vsel %vm619, %v605, 0
        %v651 = vsel %vm619, %v606, 0
        %v654 = vsel %vm619, %v607, 0
        %v657 = vsel %vm619, %v608, 0
        %v660 = vsel %vm619, %v609, 0
        %v663 = vsel %vm619, %v610, 0
        %v666 = vsel %vm619, %v611, 0
        %668 = vmatprep.subr.mxu0 0.0
        %669 = vmatpush1.msra.mxu0 %v618
        %670 = vmatprep.subr.mxu0 0.0
        %671 = vmatpush1.msra.mxu0 0.0
        %672 = vmatprep.subr.mxu0 0.0
        %673 = vmatpush1.msra.mxu0 0.0
        %674 = vmatprep.subr.mxu0 0.0
        %675 = vmatpush1.msra.mxu0 0.0
        %676 = vmatprep.subr.mxu0 0.0
        %677 = vmatpush1.msra.mxu0 0.0
        %678 = vmatprep.subr.mxu0 0.0
        %679 = vmatpush1.msra.mxu0 0.0
        %680 = vmatprep.subr.mxu0 0.0
        %681 = vmatpush1.msra.mxu0 0.0
        %682 = vmatprep.subr.mxu0 0.0
        %683 = vmatpush1.msra.mxu0 0.0
        %684 = vmatprep.subr.mxu0 0.0
        %685 = vmatpush1.msra.mxu0 0.0
        %686 = vmatprep.subr.mxu0 0.0
        %687 = vmatpush1.msra.mxu0 0.0
        %688 = vmatprep.subr.mxu0 0.0
        %689 = vmatpush1.msra.mxu0 0.0
        %690 = vmatprep.subr.mxu0 0.0
        %691 = vmatpush1.msra.mxu0 0.0
        %692 = vmatprep.subr.mxu0 0.0
        %693 = vmatpush1.msra.mxu0 0.0
        %694 = vmatprep.subr.mxu0 0.0
        %695 = vmatpush1.msra.mxu0 0.0
        %696 = vmatprep.subr.mxu0 0.0
        %697 = vmatpush1.msra.mxu0 0.0
        %698 = vmatprep.subr.mxu0 0.0
        %699 = vmatpush1.msra.mxu0 0.0
        %700 = vmatprep.subr.mxu0 0.0
        %701 = vmatpush1.msra.mxu0 0.0
        %702 = vmatprep.subr.mxu0 0.0
        %703 = vmatpush1.msra.mxu0 0.0
        %704 = vmatprep.subr.mxu0 0.0
        %705 = vmatpush1.msra.mxu0 0.0
        %706 = vmatprep.subr.mxu0 0.0
        %707 = vmatpush1.msra.mxu0 0.0
        %708 = vmatprep.subr.mxu0 0.0
        %709 = vmatpush1.msra.mxu0 0.0
        %710 = vmatprep.subr.mxu0 0.0
        %711 = vmatpush1.msra.mxu0 0.0
        %712 = vmatprep.subr.mxu0 0.0
        %713 = vmatpush1.msra.mxu0 0.0
        %714 = vmatprep.subr.mxu0 0.0
        %715 = vmatpush1.msra.mxu0 0.0
        %716 = vmatprep.subr.mxu0 0.0
        %717 = vmatpush1.msra.mxu0 0.0
        %718 = vmatprep.subr.mxu0 0.0
        %719 = vmatpush1.msra.mxu0 0.0
        %720 = vmatprep.subr.mxu0 0.0
        %721 = vmatpush1.msra.mxu0 0.0
        %722 = vmatprep.subr.mxu0 0.0
        %723 = vmatpush1.msra.mxu0 0.0
        %724 = vmatprep.subr.mxu0 0.0
        %725 = vmatpush1.msra.mxu0 0.0
        %726 = vmatprep.subr.mxu0 0.0
        %727 = vmatpush1.msra.mxu0 0.0
        %728 = vmatprep.subr.mxu0 0.0
        %729 = vmatpush1.msra.mxu0 0.0
        %730 = vmatprep.subr.mxu0 0.0
        %731 = vmatpush1.msra.mxu0 0.0
        %732 = vmatprep.mubr.f32.mxu0 0.0
        %733 = vmatmul.mubr.f32.gmra.mrb[0].mxu0 %v621
        %v734 = vpop.f32.mrb[0].mxu0
        %v735 = vadd.f32 0.0, %v734
        %v736 = vpop.f32.mrb[0].mxu0
        %737 = vmatprep.mubr.f32.mxu0 0.0
        %738 = vmatmul.mubr.f32.gmra.mrb[0].mxu0 %v624
        %v739 = vpop.f32.mrb[0].mxu0
        %v740 = vadd.f32 0.0, %v739
        %v741 = vpop.f32.mrb[0].mxu0
        %742 = vmatprep.mubr.f32.mxu0 0.0
        %743 = vmatmul.mubr.f32.gmra.mrb[0].mxu0 %v627
        %v744 = vpop.f32.mrb[0].mxu0
        %v745 = vadd.f32 0.0, %v744
        %v746 = vpop.f32.mrb[0].mxu0
        %747 = vmatprep.mubr.f32.mxu0 0.0
        %748 = vmatmul.mubr.f32.gmra.mrb[0].mxu0 %v630
        %v749 = vpop.f32.mrb[0].mxu0
        %v750 = vadd.f32 0.0, %v749
        %v751 = vpop.f32.mrb[0].mxu0
        %752 = vmatprep.mubr.f32.mxu0 0.0
        %753 = vmatmul.mubr.f32.gmra.mrb[0].mxu0 %v633
        %v754 = vpop.f32.mrb[0].mxu0
        %v755 = vadd.f32 0.0, %v754
        %v756 = vpop.f32.mrb[0].mxu0
        %757 = vmatprep.mubr.f32.mxu0 0.0
        %758 = vmatmul.mubr.f32.gmra.mrb[0].mxu0 %v636
        %v759 = vpop.f32.mrb[0].mxu0
        %v760 = vadd.f32 0.0, %v759
        %v761 = vpop.f32.mrb[0].mxu0
        %762 = vmatprep.mubr.f32.mxu0 0.0
        %763 = vmatmul.mubr.f32.gmra.mrb[0].mxu0 %v639
        %v764 = vpop.f32.mrb[0].mxu0
        %v765 = vadd.f32 0.0, %v764
        %v766 = vpop.f32.mrb[0].mxu0
        %767 = vmatprep.mubr.f32.mxu0 0.0
        %768 = vmatmul.mubr.f32.gmra.mrb[0].mxu0 %v642
        %v769 = vpop.f32.mrb[0].mxu0
        %v770 = vadd.f32 0.0, %v769
        %v771 = vpop.f32.mrb[0].mxu0
        %772 = vmatprep.mubr.f32.mxu0 0.0
        %773 = vmatmul.mubr.f32.gmra.mrb[0].mxu0 %v645
        %v774 = vpop.f32.mrb[0].mxu0
        %v775 = vadd.f32 0.0, %v774
        %v776 = vpop.f32.mrb[0].mxu0
        %777 = vmatprep.mubr.f32.mxu0 0.0
        %778 = vmatmul.mubr.f32.gmra.mrb[0].mxu0 %v648
        %v779 = vpop.f32.mrb[0].mxu0
        %v780 = vadd.f32 0.0, %v779
        %v781 = vpop.f32.mrb[0].mxu0
        %782 = vmatprep.mubr.f32.mxu0 0.0
        %783 = vmatmul.mubr.f32.gmra.mrb[0].mxu0 %v651
        %v784 = vpop.f32.mrb[0].mxu0
        %v785 = vadd.f32 0.0, %v784
        %v786 = vpop.f32.mrb[0].mxu0
        %787 = vmatprep.mubr.f32.mxu0 0.0
        %788 = vmatmul.mubr.f32.gmra.mrb[0].mxu0 %v654
        %v789 = vpop.f32.mrb[0].mxu0
        %v790 = vadd.f32 0.0, %v789
        %v791 = vpop.f32.mrb[0].mxu0
        %792 = vmatprep.mubr.f32.mxu0 0.0
        %793 = vmatmul.mubr.f32.gmra.mrb[0].mxu0 %v657
        %v794 = vpop.f32.mrb[0].mxu0
        %v795 = vadd.f32 0.0, %v794
        %v796 = vpop.f32.mrb[0].mxu0
        %797 = vmatprep.mubr.f32.mxu0 0.0
        %798 = vmatmul.mubr.f32.gmra.mrb[0].mxu0 %v660
        %v799 = vpop.f32.mrb[0].mxu0
        %v800 = vadd.f32 0.0, %v799
        %v801 = vpop.f32.mrb[0].mxu0
        %802 = vmatprep.mubr.f32.mxu0 0.0
        %803 = vmatmul.mubr.f32.gmra.mrb[0].mxu0 %v663
        %v804 = vpop.f32.mrb[0].mxu0
        %v805 = vadd.f32 0.0, %v804
        %v806 = vpop.f32.mrb[0].mxu0
        %807 = vmatprep.mubr.f32.mxu0 0.0
        %808 = vmatmul.mubr.f32.gmra.mrb[0].mxu0 %v666
        %v809 = vpop.f32.mrb[0].mxu0
        %v810 = vadd.f32 0.0, %v809
        %v811 = vpop.f32.mrb[0].mxu0
        %812 = vdwg.mxu0
        %vm813 = vcmask 130048
        %v815 = vsel %vm813, %v567, 0
        %v818 = vsel %vm813, %v568, 0
        %v821 = vsel %vm813, %v569, 0
        %v824 = vsel %vm813, %v570, 0
        %v827 = vsel %vm813, %v571, 0
        %v830 = vsel %vm813, %v572, 0
        %v833 = vsel %vm813, %v573, 0
        %v836 = vsel %vm813, %v574, 0
        %v839 = vsel %vm813, %v575, 0
        %v842 = vsel %vm813, %v576, 0
        %v845 = vsel %vm813, %v577, 0
        %v848 = vsel %vm813, %v578, 0
        %v851 = vsel %vm813, %v579, 0
        %v854 = vsel %vm813, %v580, 0
        %v857 = vsel %vm813, %v581, 0
        %v860 = vsel %vm813, %v582, 0
        %862 = vmatprep.subr.mxu0 0.0
        %863 = vmatpush1.msra.mxu0 %v594
        %864 = vmatprep.subr.mxu0 0.0
        %865 = vmatpush1.msra.mxu0 %v595
        %866 = vmatprep.subr.mxu0 0.0
        %867 = vmatpush1.msra.mxu0 0.0
        %868 = vmatprep.subr.mxu0 0.0
        %869 = vmatpush1.msra.mxu0 0.0
        %870 = vmatprep.subr.mxu0 0.0
        %871 = vmatpush1.msra.mxu0 0.0
        %872 = vmatprep.subr.mxu0 0.0
        %873 = vmatpush1.msra.mxu0 0.0
        %874 = vmatprep.subr.mxu0 0.0
        %875 = vmatpush1.msra.mxu0 0.0
        %876 = vmatprep.subr.mxu0 0.0
        %877 = vmatpush1.msra.mxu0 0.0
        %878 = vmatprep.subr.mxu0 0.0
        %879 = vmatpush1.msra.mxu0 0.0
        %880 = vmatprep.subr.mxu0 0.0
        %881 = vmatpush1.msra.mxu0 0.0
        %882 = vmatprep.subr.mxu0 0.0
        %883 = vmatpush1.msra.mxu0 0.0
        %884 = vmatprep.subr.mxu0 0.0
        %885 = vmatpush1.msra.mxu0 0.0
        %886 = vmatprep.subr.mxu0 0.0
        %887 = vmatpush1.msra.mxu0 0.0
        %888 = vmatprep.subr.mxu0 0.0
        %889 = vmatpush1.msra.mxu0 0.0
        %890 = vmatprep.subr.mxu0 0.0
        %891 = vmatpush1.msra.mxu0 0.0
        %892 = vmatprep.subr.mxu0 0.0
        %893 = vmatpush1.msra.mxu0 0.0
        %894 = vmatprep.subr.mxu0 0.0
        %895 = vmatpush1.msra.mxu0 0.0
        %896 = vmatprep.subr.mxu0 0.0
        %897 = vmatpush1.msra.mxu0 0.0
        %898 = vmatprep.subr.mxu0 0.0
        %899 = vmatpush1.msra.mxu0 0.0
        %900 = vmatprep.subr.mxu0 0.0
        %901 = vmatpush1.msra.mxu0 0.0
        %902 = vmatprep.subr.mxu0 0.0
        %903 = vmatpush1.msra.mxu0 0.0
        %904 = vmatprep.subr.mxu0 0.0
        %905 = vmatpush1.msra.mxu0 0.0
        %906 = vmatprep.subr.mxu0 0.0
        %907 = vmatpush1.msra.mxu0 0.0
        %908 = vmatprep.subr.mxu0 0.0
        %909 = vmatpush1.msra.mxu0 0.0
        %910 = vmatprep.subr.mxu0 0.0
        %911 = vmatpush1.msra.mxu0 0.0
        %912 = vmatprep.subr.mxu0 0.0
        %913 = vmatpush1.msra.mxu0 0.0
        %914 = vmatprep.subr.mxu0 0.0
        %915 = vmatpush1.msra.mxu0 0.0
        %916 = vmatprep.subr.mxu0 0.0
        %917 = vmatpush1.msra.mxu0 0.0
        %918 = vmatprep.subr.mxu0 0.0
        %919 = vmatpush1.msra.mxu0 0.0
        %920 = vmatprep.subr.mxu0 0.0
        %921 = vmatpush1.msra.mxu0 0.0
        %922 = vmatprep.subr.mxu0 0.0
        %923 = vmatpush1.msra.mxu0 0.0
        %924 = vmatprep.subr.mxu0 0.0
        %925 = vmatpush1.msra.mxu0 0.0
        %926 = vmatprep.mubr.f32.mxu0 0.0
        %927 = vmatmul.mubr.f32.gmra.mrb[0].mxu0 %v815
        %v928 = vpop.f32.mrb[0].mxu0
        %v929 = vadd.f32 %v735, %v928
        %v930 = vpop.f32.mrb[0].mxu0
        %931 = vmatprep.mubr.f32.mxu0 0.0
        %932 = vmatmul.mubr.f32.gmra.mrb[0].mxu0 %v818
        %v933 = vpop.f32.mrb[0].mxu0
        %v934 = vadd.f32 %v740, %v933
        %v935 = vpop.f32.mrb[0].mxu0
        %936 = vmatprep.mubr.f32.mxu0 0.0
        %937 = vmatmul.mubr.f32.gmra.mrb[0].mxu0 %v821
        %v938 = vpop.f32.mrb[0].mxu0
        %v939 = vadd.f32 %v745, %v938
        %v940 = vpop.f32.mrb[0].mxu0
        %941 = vmatprep.mubr.f32.mxu0 0.0
        %942 = vmatmul.mubr.f32.gmra.mrb[0].mxu0 %v824
        %v943 = vpop.f32.mrb[0].mxu0
        %v944 = vadd.f32 %v750, %v943
        %v945 = vpop.f32.mrb[0].mxu0
        %946 = vmatprep.mubr.f32.mxu0 0.0
        %947 = vmatmul.mubr.f32.gmra.mrb[0].mxu0 %v827
        %v948 = vpop.f32.mrb[0].mxu0
        %v949 = vadd.f32 %v755, %v948
        %v950 = vpop.f32.mrb[0].mxu0
        %951 = vmatprep.mubr.f32.mxu0 0.0
        %952 = vmatmul.mubr.f32.gmra.mrb[0].mxu0 %v830
        %v953 = vpop.f32.mrb[0].mxu0
        %v954 = vadd.f32 %v760, %v953
        %v955 = vpop.f32.mrb[0].mxu0
        %956 = vmatprep.mubr.f32.mxu0 0.0
        %957 = vmatmul.mubr.f32.gmra.mrb[0].mxu0 %v833
        %v958 = vpop.f32.mrb[0].mxu0
        %v959 = vadd.f32 %v765, %v958
        %v960 = vpop.f32.mrb[0].mxu0
        %961 = vmatprep.mubr.f32.mxu0 0.0
        %962 = vmatmul.mubr.f32.gmra.mrb[0].mxu0 %v836
        %v963 = vpop.f32.mrb[0].mxu0
        %v964 = vadd.f32 %v770, %v963
        %v965 = vpop.f32.mrb[0].mxu0
        %966 = vmatprep.mubr.f32.mxu0 0.0
        %967 = vmatmul.mubr.f32.gmra.mrb[0].mxu0 %v839
        %v968 = vpop.f32.mrb[0].mxu0
        %v969 = vadd.f32 %v775, %v968
        %v970 = vpop.f32.mrb[0].mxu0
        %971 = vmatprep.mubr.f32.mxu0 0.0
        %972 = vmatmul.mubr.f32.gmra.mrb[0].mxu0 %v842
        %v973 = vpop.f32.mrb[0].mxu0
        %v974 = vadd.f32 %v780, %v973
        %v975 = vpop.f32.mrb[0].mxu0
        %976 = vmatprep.mubr.f32.mxu0 0.0
        %977 = vmatmul.mubr.f32.gmra.mrb[0].mxu0 %v845
        %v978 = vpop.f32.mrb[0].mxu0
        %v979 = vadd.f32 %v785, %v978
        %v980 = vpop.f32.mrb[0].mxu0
        %981 = vmatprep.mubr.f32.mxu0 0.0
        %982 = vmatmul.mubr.f32.gmra.mrb[0].mxu0 %v848
        %v983 = vpop.f32.mrb[0].mxu0
        %v984 = vadd.f32 %v790, %v983
        %v985 = vpop.f32.mrb[0].mxu0
        %986 = vmatprep.mubr.f32.mxu0 0.0
        %987 = vmatmul.mubr.f32.gmra.mrb[0].mxu0 %v851
        %v988 = vpop.f32.mrb[0].mxu0
        %v989 = vadd.f32 %v795, %v988
        %v990 = vpop.f32.mrb[0].mxu0
        %991 = vmatprep.mubr.f32.mxu0 0.0
        %992 = vmatmul.mubr.f32.gmra.mrb[0].mxu0 %v854
        %v993 = vpop.f32.mrb[0].mxu0
        %v994 = vadd.f32 %v800, %v993
        %v995 = vpop.f32.mrb[0].mxu0
        %996 = vmatprep.mubr.f32.mxu0 0.0
        %997 = vmatmul.mubr.f32.gmra.mrb[0].mxu0 %v857
        %v998 = vpop.f32.mrb[0].mxu0
        %v999 = vadd.f32 %v805, %v998
        %v1000 = vpop.f32.mrb[0].mxu0
        %1001 = vmatprep.mubr.f32.mxu0 0.0
        %1002 = vmatmul.mubr.f32.gmra.mrb[0].mxu0 %v860
        %v1003 = vpop.f32.mrb[0].mxu0
        %v1004 = vadd.f32 %v810, %v1003
        %v1005 = vpop.f32.mrb[0].mxu0
        %1006 = vdwg.mxu0
        %v1007 = vld [vmem:[#allocation10] sm:$0xff]
        %v1008 = vld [vmem:[#allocation10 + $0x8] sm:$0xff]
        %v1009 = vld [vmem:[#allocation10 + $0x10] sm:$0xff]
        %v1010 = vld [vmem:[#allocation10 + $0x18] sm:$0xff]
        %v1011 = vld [vmem:[#allocation10 + $0x20] sm:$0xff]
        %v1012 = vld [vmem:[#allocation10 + $0x28] sm:$0xff]
        %v1013 = vld [vmem:[#allocation10 + $0x30] sm:$0xff]
        %v1014 = vld [vmem:[#allocation10 + $0x38] sm:$0xff]
        %v1015 = vld [vmem:[#allocation10 + $0x40] sm:$0xff]
        %v1016 = vld [vmem:[#allocation10 + $0x48] sm:$0xff]
        %v1017 = vld [vmem:[#allocation10 + $0x50] sm:$0xff]
        %v1018 = vld [vmem:[#allocation10 + $0x58] sm:$0xff]
        %v1019 = vld [vmem:[#allocation10 + $0x60] sm:$0xff]
        %v1020 = vld [vmem:[#allocation10 + $0x68] sm:$0xff]
        %v1021 = vld [vmem:[#allocation10 + $0x70] sm:$0xff]
        %v1022 = vld [vmem:[#allocation10 + $0x78] sm:$0xff]
        %v1023 = vlaneseq
        %v1024 = vshrl.u32 %v1023, 7
        %v1025 = vsub.s32 2, %v1024
        %v1026 = vrot.slane %v566, %v1025
        %vm1027 = vcmp.eq.s32.totalorder %v584, %v1026
        %v1028 = vsel %vm1027, 1, 0
        %v1029 = vcvt.s32.f32 %v1028
        %v1031 = vsel %vm619, %v1007, 0
        %v1034 = vsel %vm619, %v1008, 0
        %v1037 = vsel %vm619, %v1009, 0
        %v1040 = vsel %vm619, %v1010, 0
        %v1043 = vsel %vm619, %v1011, 0
        %v1046 = vsel %vm619, %v1012, 0
        %v1049 = vsel %vm619, %v1013, 0
        %v1052 = vsel %vm619, %v1014, 0
        %v1055 = vsel %vm619, %v1015, 0
        %v1058 = vsel %vm619, %v1016, 0
        %v1061 = vsel %vm619, %v1017, 0
        %v1064 = vsel %vm619, %v1018, 0
        %v1067 = vsel %vm619, %v1019, 0
        %v1070 = vsel %vm619, %v1020, 0
        %v1073 = vsel %vm619, %v1021, 0
        %v1076 = vsel %vm619, %v1022, 0
        %1078 = vmatprep.subr.mxu0 0.0
        %1079 = vmatpush1.msra.mxu0 %v1029
        %1080 = vmatprep.subr.mxu0 0.0
        %1081 = vmatpush1.msra.mxu0 0.0
        %1082 = vmatprep.subr.mxu0 0.0
        %1083 = vmatpush1.msra.mxu0 0.0
        %1084 = vmatprep.subr.mxu0 0.0
        %1085 = vmatpush1.msra.mxu0 0.0
        %1086 = vmatprep.subr.mxu0 0.0
        %1087 = vmatpush1.msra.mxu0 0.0
        %1088 = vmatprep.subr.mxu0 0.0
        %1089 = vmatpush1.msra.mxu0 0.0
        %1090 = vmatprep.subr.mxu0 0.0
        %1091 = vmatpush1.msra.mxu0 0.0
        %1092 = vmatprep.subr.mxu0 0.0
        %1093 = vmatpush1.msra.mxu0 0.0
        %1094 = vmatprep.subr.mxu0 0.0
        %1095 = vmatpush1.msra.mxu0 0.0
        %1096 = vmatprep.subr.mxu0 0.0
        %1097 = vmatpush1.msra.mxu0 0.0
        %1098 = vmatprep.subr.mxu0 0.0
        %1099 = vmatpush1.msra.mxu0 0.0
        %1100 = vmatprep.subr.mxu0 0.0
        %1101 = vmatpush1.msra.mxu0 0.0
        %1102 = vmatprep.subr.mxu0 0.0
        %1103 = vmatpush1.msra.mxu0 0.0
        %1104 = vmatprep.subr.mxu0 0.0
        %1105 = vmatpush1.msra.mxu0 0.0
        %1106 = vmatprep.subr.mxu0 0.0
        %1107 = vmatpush1.msra.mxu0 0.0
        %1108 = vmatprep.subr.mxu0 0.0
        %1109 = vmatpush1.msra.mxu0 0.0
        %1110 = vmatprep.subr.mxu0 0.0
        %1111 = vmatpush1.msra.mxu0 0.0
        %1112 = vmatprep.subr.mxu0 0.0
        %1113 = vmatpush1.msra.mxu0 0.0
        %1114 = vmatprep.subr.mxu0 0.0
        %1115 = vmatpush1.msra.mxu0 0.0
        %1116 = vmatprep.subr.mxu0 0.0
        %1117 = vmatpush1.msra.mxu0 0.0
        %1118 = vmatprep.subr.mxu0 0.0
        %1119 = vmatpush1.msra.mxu0 0.0
        %1120 = vmatprep.subr.mxu0 0.0
        %1121 = vmatpush1.msra.mxu0 0.0
        %1122 = vmatprep.subr.mxu0 0.0
        %1123 = vmatpush1.msra.mxu0 0.0
        %1124 = vmatprep.subr.mxu0 0.0
        %1125 = vmatpush1.msra.mxu0 0.0
        %1126 = vmatprep.subr.mxu0 0.0
        %1127 = vmatpush1.msra.mxu0 0.0
        %1128 = vmatprep.subr.mxu0 0.0
        %1129 = vmatpush1.msra.mxu0 0.0
        %1130 = vmatprep.subr.mxu0 0.0
        %1131 = vmatpush1.msra.mxu0 0.0
        %1132 = vmatprep.subr.mxu0 0.0
        %1133 = vmatpush1.msra.mxu0 0.0
        %1134 = vmatprep.subr.mxu0 0.0
        %1135 = vmatpush1.msra.mxu0 0.0
        %1136 = vmatprep.subr.mxu0 0.0
        %1137 = vmatpush1.msra.mxu0 0.0
        %1138 = vmatprep.subr.mxu0 0.0
        %1139 = vmatpush1.msra.mxu0 0.0
        %1140 = vmatprep.subr.mxu0 0.0
        %1141 = vmatpush1.msra.mxu0 0.0
        %1142 = vmatprep.mubr.f32.mxu0 0.0
        %1143 = vmatmul.mubr.f32.gmra.mrb[0].mxu0 %v1031
        %v1144 = vpop.f32.mrb[0].mxu0
        %v1145 = vadd.f32 0.0, %v1144
        %v1146 = vpop.f32.mrb[0].mxu0
        %1147 = vmatprep.mubr.f32.mxu0 0.0
        %1148 = vmatmul.mubr.f32.gmra.mrb[0].mxu0 %v1034
        %v1149 = vpop.f32.mrb[0].mxu0
        %v1150 = vadd.f32 0.0, %v1149
        %v1151 = vpop.f32.mrb[0].mxu0
        %1152 = vmatprep.mubr.f32.mxu0 0.0
        %1153 = vmatmul.mubr.f32.gmra.mrb[0].mxu0 %v1037
        %v1154 = vpop.f32.mrb[0].mxu0
        %v1155 = vadd.f32 0.0, %v1154
        %v1156 = vpop.f32.mrb[0].mxu0
        %1157 = vmatprep.mubr.f32.mxu0 0.0
        %1158 = vmatmul.mubr.f32.gmra.mrb[0].mxu0 %v1040
        %v1159 = vpop.f32.mrb[0].mxu0
        %v1160 = vadd.f32 0.0, %v1159
        %v1161 = vpop.f32.mrb[0].mxu0
        %1162 = vmatprep.mubr.f32.mxu0 0.0
        %1163 = vmatmul.mubr.f32.gmra.mrb[0].mxu0 %v1043
        %v1164 = vpop.f32.mrb[0].mxu0
        %v1165 = vadd.f32 0.0, %v1164
        %v1166 = vpop.f32.mrb[0].mxu0
        %1167 = vmatprep.mubr.f32.mxu0 0.0
        %1168 = vmatmul.mubr.f32.gmra.mrb[0].mxu0 %v1046
        %v1169 = vpop.f32.mrb[0].mxu0
        %v1170 = vadd.f32 0.0, %v1169
        %v1171 = vpop.f32.mrb[0].mxu0
        %1172 = vmatprep.mubr.f32.mxu0 0.0
        %1173 = vmatmul.mubr.f32.gmra.mrb[0].mxu0 %v1049
        %v1174 = vpop.f32.mrb[0].mxu0
        %v1175 = vadd.f32 0.0, %v1174
        %v1176 = vpop.f32.mrb[0].mxu0
        %1177 = vmatprep.mubr.f32.mxu0 0.0
        %1178 = vmatmul.mubr.f32.gmra.mrb[0].mxu0 %v1052
        %v1179 = vpop.f32.mrb[0].mxu0
        %v1180 = vadd.f32 0.0, %v1179
        %v1181 = vpop.f32.mrb[0].mxu0
        %1182 = vmatprep.mubr.f32.mxu0 0.0
        %1183 = vmatmul.mubr.f32.gmra.mrb[0].mxu0 %v1055
        %v1184 = vpop.f32.mrb[0].mxu0
        %v1185 = vadd.f32 0.0, %v1184
        %v1186 = vpop.f32.mrb[0].mxu0
        %1187 = vmatprep.mubr.f32.mxu0 0.0
        %1188 = vmatmul.mubr.f32.gmra.mrb[0].mxu0 %v1058
        %v1189 = vpop.f32.mrb[0].mxu0
        %v1190 = vadd.f32 0.0, %v1189
        %v1191 = vpop.f32.mrb[0].mxu0
        %1192 = vmatprep.mubr.f32.mxu0 0.0
        %1193 = vmatmul.mubr.f32.gmra.mrb[0].mxu0 %v1061
        %v1194 = vpop.f32.mrb[0].mxu0
        %v1195 = vadd.f32 0.0, %v1194
        %v1196 = vpop.f32.mrb[0].mxu0
        %1197 = vmatprep.mubr.f32.mxu0 0.0
        %1198 = vmatmul.mubr.f32.gmra.mrb[0].mxu0 %v1064
        %v1199 = vpop.f32.mrb[0].mxu0
        %v1200 = vadd.f32 0.0, %v1199
        %v1201 = vpop.f32.mrb[0].mxu0
        %1202 = vmatprep.mubr.f32.mxu0 0.0
        %1203 = vmatmul.mubr.f32.gmra.mrb[0].mxu0 %v1067
        %v1204 = vpop.f32.mrb[0].mxu0
        %v1205 = vadd.f32 0.0, %v1204
        %v1206 = vpop.f32.mrb[0].mxu0
        %1207 = vmatprep.mubr.f32.mxu0 0.0
        %1208 = vmatmul.mubr.f32.gmra.mrb[0].mxu0 %v1070
        %v1209 = vpop.f32.mrb[0].mxu0
        %v1210 = vadd.f32 0.0, %v1209
        %v1211 = vpop.f32.mrb[0].mxu0
        %1212 = vmatprep.mubr.f32.mxu0 0.0
        %1213 = vmatmul.mubr.f32.gmra.mrb[0].mxu0 %v1073
        %v1214 = vpop.f32.mrb[0].mxu0
        %v1215 = vadd.f32 0.0, %v1214
        %v1216 = vpop.f32.mrb[0].mxu0
        %1217 = vmatprep.mubr.f32.mxu0 0.0
        %1218 = vmatmul.mubr.f32.gmra.mrb[0].mxu0 %v1076
        %v1219 = vpop.f32.mrb[0].mxu0
        %v1220 = vadd.f32 0.0, %v1219
        %v1221 = vpop.f32.mrb[0].mxu0
        %1222 = vdwg.mxu0
        %v1223 = vadd.f32 %v929, %v1145
        %v1224 = vadd.f32 %v934, %v1150
        %v1225 = vadd.f32 %v939, %v1155
        %v1226 = vadd.f32 %v944, %v1160
        %v1227 = vadd.f32 %v949, %v1165
        %v1228 = vadd.f32 %v954, %v1170
        %v1229 = vadd.f32 %v959, %v1175
        %v1230 = vadd.f32 %v964, %v1180
        %v1231 = vadd.f32 %v969, %v1185
        %v1232 = vadd.f32 %v974, %v1190
        %v1233 = vadd.f32 %v979, %v1195
        %v1234 = vadd.f32 %v984, %v1200
        %v1235 = vadd.f32 %v989, %v1205
        %v1236 = vadd.f32 %v994, %v1210
        %v1237 = vadd.f32 %v999, %v1215
        %v1238 = vadd.f32 %v1004, %v1220
        %v1239 = vld [vmem:[#allocation11] sm:$0xff]
        %v1240 = vld [vmem:[#allocation11 + $0x8] sm:$0xff]
        %v1241 = vld [vmem:[#allocation11 + $0x10] sm:$0xff]
        %v1242 = vld [vmem:[#allocation11 + $0x18] sm:$0xff]
        %v1243 = vld [vmem:[#allocation11 + $0x20] sm:$0xff]
        %v1244 = vld [vmem:[#allocation11 + $0x28] sm:$0xff]
        %v1245 = vld [vmem:[#allocation11 + $0x30] sm:$0xff]
        %v1246 = vld [vmem:[#allocation11 + $0x38] sm:$0xff]
        %v1247 = vld [vmem:[#allocation11 + $0x40] sm:$0xff]
        %v1248 = vld [vmem:[#allocation11 + $0x48] sm:$0xff]
        %v1249 = vld [vmem:[#allocation11 + $0x50] sm:$0xff]
        %v1250 = vld [vmem:[#allocation11 + $0x58] sm:$0xff]
        %v1251 = vld [vmem:[#allocation11 + $0x60] sm:$0xff]
        %v1252 = vld [vmem:[#allocation11 + $0x68] sm:$0xff]
        %v1253 = vld [vmem:[#allocation11 + $0x70] sm:$0xff]
        %v1254 = vld [vmem:[#allocation11 + $0x78] sm:$0xff]
        %v1255 = vld [vmem:[#allocation13] sm:$0xff]
        %v1256 = vld [vmem:[#allocation13 + $0x8] sm:$0xff]
        %v1257 = vld [vmem:[#allocation13 + $0x10] sm:$0xff]
        %v1258 = vld [vmem:[#allocation13 + $0x18] sm:$0xff]
        %v1259 = vld [vmem:[#allocation13 + $0x20] sm:$0xff]
        %v1260 = vld [vmem:[#allocation13 + $0x28] sm:$0xff]
        %v1261 = vld [vmem:[#allocation13 + $0x30] sm:$0xff]
        %v1262 = vld [vmem:[#allocation13 + $0x38] sm:$0xff]
        %v1263 = vld [vmem:[#allocation13 + $0x40] sm:$0xff]
        %v1264 = vld [vmem:[#allocation13 + $0x48] sm:$0xff]
        %v1265 = vld [vmem:[#allocation13 + $0x50] sm:$0xff]
        %v1266 = vld [vmem:[#allocation13 + $0x58] sm:$0xff]
        %v1267 = vld [vmem:[#allocation13 + $0x60] sm:$0xff]
        %v1268 = vld [vmem:[#allocation13 + $0x68] sm:$0xff]
        %v1269 = vld [vmem:[#allocation13 + $0x70] sm:$0xff]
        %v1270 = vld [vmem:[#allocation13 + $0x78] sm:$0xff]
        %v1271 = vld [vmem:[%s485] sm:$0xff]
        %v1273 = vsel %vm619, %v1239, 0
        %v1276 = vsel %vm619, %v1240, 0
        %v1279 = vsel %vm619, %v1241, 0
        %v1282 = vsel %vm619, %v1242, 0
        %v1285 = vsel %vm619, %v1243, 0
        %v1288 = vsel %vm619, %v1244, 0
        %v1291 = vsel %vm619, %v1245, 0
        %v1294 = vsel %vm619, %v1246, 0
        %v1297 = vsel %vm619, %v1247, 0
        %v1300 = vsel %vm619, %v1248, 0
        %v1303 = vsel %vm619, %v1249, 0
        %v1306 = vsel %vm619, %v1250, 0
        %v1309 = vsel %vm619, %v1251, 0
        %v1312 = vsel %vm619, %v1252, 0
        %v1315 = vsel %vm619, %v1253, 0
        %v1318 = vsel %vm619, %v1254, 0
        %1320 = vmatprep.subr.mxu0 0.0
        %1321 = vmatpush1.msra.mxu0 %v1271
        %1322 = vmatprep.subr.mxu0 0.0
        %1323 = vmatpush1.msra.mxu0 0.0
        %1324 = vmatprep.subr.mxu0 0.0
        %1325 = vmatpush1.msra.mxu0 0.0
        %1326 = vmatprep.subr.mxu0 0.0
        %1327 = vmatpush1.msra.mxu0 0.0
        %1328 = vmatprep.subr.mxu0 0.0
        %1329 = vmatpush1.msra.mxu0 0.0
        %1330 = vmatprep.subr.mxu0 0.0
        %1331 = vmatpush1.msra.mxu0 0.0
        %1332 = vmatprep.subr.mxu0 0.0
        %1333 = vmatpush1.msra.mxu0 0.0
        %1334 = vmatprep.subr.mxu0 0.0
        %1335 = vmatpush1.msra.mxu0 0.0
        %1336 = vmatprep.subr.mxu0 0.0
        %1337 = vmatpush1.msra.mxu0 0.0
        %1338 = vmatprep.subr.mxu0 0.0
        %1339 = vmatpush1.msra.mxu0 0.0
        %1340 = vmatprep.subr.mxu0 0.0
        %1341 = vmatpush1.msra.mxu0 0.0
        %1342 = vmatprep.subr.mxu0 0.0
        %1343 = vmatpush1.msra.mxu0 0.0
        %1344 = vmatprep.subr.mxu0 0.0
        %1345 = vmatpush1.msra.mxu0 0.0
        %1346 = vmatprep.subr.mxu0 0.0
        %1347 = vmatpush1.msra.mxu0 0.0
        %1348 = vmatprep.subr.mxu0 0.0
        %1349 = vmatpush1.msra.mxu0 0.0
        %1350 = vmatprep.subr.mxu0 0.0
        %1351 = vmatpush1.msra.mxu0 0.0
        %1352 = vmatprep.subr.mxu0 0.0
        %1353 = vmatpush1.msra.mxu0 0.0
        %1354 = vmatprep.subr.mxu0 0.0
        %1355 = vmatpush1.msra.mxu0 0.0
        %1356 = vmatprep.subr.mxu0 0.0
        %1357 = vmatpush1.msra.mxu0 0.0
        %1358 = vmatprep.subr.mxu0 0.0
        %1359 = vmatpush1.msra.mxu0 0.0
        %1360 = vmatprep.subr.mxu0 0.0
        %1361 = vmatpush1.msra.mxu0 0.0
        %1362 = vmatprep.subr.mxu0 0.0
        %1363 = vmatpush1.msra.mxu0 0.0
        %1364 = vmatprep.subr.mxu0 0.0
        %1365 = vmatpush1.msra.mxu0 0.0
        %1366 = vmatprep.subr.mxu0 0.0
        %1367 = vmatpush1.msra.mxu0 0.0
        %1368 = vmatprep.subr.mxu0 0.0
        %1369 = vmatpush1.msra.mxu0 0.0
        %1370 = vmatprep.subr.mxu0 0.0
        %1371 = vmatpush1.msra.mxu0 0.0
        %1372 = vmatprep.subr.mxu0 0.0
        %1373 = vmatpush1.msra.mxu0 0.0
        %1374 = vmatprep.subr.mxu0 0.0
        %1375 = vmatpush1.msra.mxu0 0.0
        %1376 = vmatprep.subr.mxu0 0.0
        %1377 = vmatpush1.msra.mxu0 0.0
        %1378 = vmatprep.subr.mxu0 0.0
        %1379 = vmatpush1.msra.mxu0 0.0
        %1380 = vmatprep.subr.mxu0 0.0
        %1381 = vmatpush1.msra.mxu0 0.0
        %1382 = vmatprep.subr.mxu0 0.0
        %1383 = vmatpush1.msra.mxu0 0.0
        %1384 = vmatprep.mubr.f32.mxu0 0.0
        %1385 = vmatmul.mubr.f32.gmra.mrb[0].mxu0 %v1273
        %v1386 = vpop.f32.mrb[0].mxu0
        %v1387 = vadd.f32 0.0, %v1386
        %v1388 = vpop.f32.mrb[0].mxu0
        %1389 = vmatprep.mubr.f32.mxu0 0.0
        %1390 = vmatmul.mubr.f32.gmra.mrb[0].mxu0 %v1276
        %v1391 = vpop.f32.mrb[0].mxu0
        %v1392 = vadd.f32 0.0, %v1391
        %v1393 = vpop.f32.mrb[0].mxu0
        %1394 = vmatprep.mubr.f32.mxu0 0.0
        %1395 = vmatmul.mubr.f32.gmra.mrb[0].mxu0 %v1279
        %v1396 = vpop.f32.mrb[0].mxu0
        %v1397 = vadd.f32 0.0, %v1396
        %v1398 = vpop.f32.mrb[0].mxu0
        %1399 = vmatprep.mubr.f32.mxu0 0.0
        %1400 = vmatmul.mubr.f32.gmra.mrb[0].mxu0 %v1282
        %v1401 = vpop.f32.mrb[0].mxu0
        %v1402 = vadd.f32 0.0, %v1401
        %v1403 = vpop.f32.mrb[0].mxu0
        %1404 = vmatprep.mubr.f32.mxu0 0.0
        %1405 = vmatmul.mubr.f32.gmra.mrb[0].mxu0 %v1285
        %v1406 = vpop.f32.mrb[0].mxu0
        %v1407 = vadd.f32 0.0, %v1406
        %v1408 = vpop.f32.mrb[0].mxu0
        %1409 = vmatprep.mubr.f32.mxu0 0.0
        %1410 = vmatmul.mubr.f32.gmra.mrb[0].mxu0 %v1288
        %v1411 = vpop.f32.mrb[0].mxu0
        %v1412 = vadd.f32 0.0, %v1411
        %v1413 = vpop.f32.mrb[0].mxu0
        %1414 = vmatprep.mubr.f32.mxu0 0.0
        %1415 = vmatmul.mubr.f32.gmra.mrb[0].mxu0 %v1291
        %v1416 = vpop.f32.mrb[0].mxu0
        %v1417 = vadd.f32 0.0, %v1416
        %v1418 = vpop.f32.mrb[0].mxu0
        %1419 = vmatprep.mubr.f32.mxu0 0.0
        %1420 = vmatmul.mubr.f32.gmra.mrb[0].mxu0 %v1294
        %v1421 = vpop.f32.mrb[0].mxu0
        %v1422 = vadd.f32 0.0, %v1421
        %v1423 = vpop.f32.mrb[0].mxu0
        %1424 = vmatprep.mubr.f32.mxu0 0.0
        %1425 = vmatmul.mubr.f32.gmra.mrb[0].mxu0 %v1297
        %v1426 = vpop.f32.mrb[0].mxu0
        %v1427 = vadd.f32 0.0, %v1426
        %v1428 = vpop.f32.mrb[0].mxu0
        %1429 = vmatprep.mubr.f32.mxu0 0.0
        %1430 = vmatmul.mubr.f32.gmra.mrb[0].mxu0 %v1300
        %v1431 = vpop.f32.mrb[0].mxu0
        %v1432 = vadd.f32 0.0, %v1431
        %v1433 = vpop.f32.mrb[0].mxu0
        %1434 = vmatprep.mubr.f32.mxu0 0.0
        %1435 = vmatmul.mubr.f32.gmra.mrb[0].mxu0 %v1303
        %v1436 = vpop.f32.mrb[0].mxu0
        %v1437 = vadd.f32 0.0, %v1436
        %v1438 = vpop.f32.mrb[0].mxu0
        %1439 = vmatprep.mubr.f32.mxu0 0.0
        %1440 = vmatmul.mubr.f32.gmra.mrb[0].mxu0 %v1306
        %v1441 = vpop.f32.mrb[0].mxu0
        %v1442 = vadd.f32 0.0, %v1441
        %v1443 = vpop.f32.mrb[0].mxu0
        %1444 = vmatprep.mubr.f32.mxu0 0.0
        %1445 = vmatmul.mubr.f32.gmra.mrb[0].mxu0 %v1309
        %v1446 = vpop.f32.mrb[0].mxu0
        %v1447 = vadd.f32 0.0, %v1446
        %v1448 = vpop.f32.mrb[0].mxu0
        %1449 = vmatprep.mubr.f32.mxu0 0.0
        %1450 = vmatmul.mubr.f32.gmra.mrb[0].mxu0 %v1312
        %v1451 = vpop.f32.mrb[0].mxu0
        %v1452 = vadd.f32 0.0, %v1451
        %v1453 = vpop.f32.mrb[0].mxu0
        %1454 = vmatprep.mubr.f32.mxu0 0.0
        %1455 = vmatmul.mubr.f32.gmra.mrb[0].mxu0 %v1315
        %v1456 = vpop.f32.mrb[0].mxu0
        %v1457 = vadd.f32 0.0, %v1456
        %v1458 = vpop.f32.mrb[0].mxu0
        %1459 = vmatprep.mubr.f32.mxu0 0.0
        %1460 = vmatmul.mubr.f32.gmra.mrb[0].mxu0 %v1318
        %v1461 = vpop.f32.mrb[0].mxu0
        %v1462 = vadd.f32 0.0, %v1461
        %v1463 = vpop.f32.mrb[0].mxu0
        %1464 = vdwg.mxu0
        %v1465 = vadd.f32 %v1223, %v1387
        %v1466 = vadd.f32 %v1224, %v1392
        %v1467 = vadd.f32 %v1225, %v1397
        %v1468 = vadd.f32 %v1226, %v1402
        %v1469 = vadd.f32 %v1227, %v1407
        %v1470 = vadd.f32 %v1228, %v1412
        %v1471 = vadd.f32 %v1229, %v1417
        %v1472 = vadd.f32 %v1230, %v1422
        %v1473 = vadd.f32 %v1231, %v1427
        %v1474 = vadd.f32 %v1232, %v1432
        %v1475 = vadd.f32 %v1233, %v1437
        %v1476 = vadd.f32 %v1234, %v1442
        %v1477 = vadd.f32 %v1235, %v1447
        %v1478 = vadd.f32 %v1236, %v1452
        %v1479 = vadd.f32 %v1237, %v1457
        %v1480 = vadd.f32 %v1238, %v1462
        %1482 = vset.pattern.permute.xlu0 0
        %1483 = vperm.xlu0 %1482, %v1255
        %v1484 = vpop.permute.xlu0 %1483
        %1487 = vset.pattern.permute.xlu0 0
        %1488 = vperm.xlu0 %1487, %v1256
        %v1489 = vpop.permute.xlu0 %1488
        %1492 = vset.pattern.permute.xlu0 0
        %1493 = vperm.xlu0 %1492, %v1257
        %v1494 = vpop.permute.xlu0 %1493
        %1497 = vset.pattern.permute.xlu0 0
        %1498 = vperm.xlu0 %1497, %v1258
        %v1499 = vpop.permute.xlu0 %1498
        %1502 = vset.pattern.permute.xlu0 0
        %1503 = vperm.xlu0 %1502, %v1259
        %v1504 = vpop.permute.xlu0 %1503
        %1507 = vset.pattern.permute.xlu0 0
        %1508 = vperm.xlu0 %1507, %v1260
        %v1509 = vpop.permute.xlu0 %1508
        %1512 = vset.pattern.permute.xlu0 0
        %1513 = vperm.xlu0 %1512, %v1261
        %v1514 = vpop.permute.xlu0 %1513
        %1517 = vset.pattern.permute.xlu0 0
        %1518 = vperm.xlu0 %1517, %v1262
        %v1519 = vpop.permute.xlu0 %1518
        %1522 = vset.pattern.permute.xlu0 0
        %1523 = vperm.xlu0 %1522, %v1263
        %v1524 = vpop.permute.xlu0 %1523
        %1527 = vset.pattern.permute.xlu0 0
        %1528 = vperm.xlu0 %1527, %v1264
        %v1529 = vpop.permute.xlu0 %1528
        %1532 = vset.pattern.permute.xlu0 0
        %1533 = vperm.xlu0 %1532, %v1265
        %v1534 = vpop.permute.xlu0 %1533
        %1537 = vset.pattern.permute.xlu0 0
        %1538 = vperm.xlu0 %1537, %v1266
        %v1539 = vpop.permute.xlu0 %1538
        %1542 = vset.pattern.permute.xlu0 0
        %1543 = vperm.xlu0 %1542, %v1267
        %v1544 = vpop.permute.xlu0 %1543
        %1547 = vset.pattern.permute.xlu0 0
        %1548 = vperm.xlu0 %1547, %v1268
        %v1549 = vpop.permute.xlu0 %1548
        %1552 = vset.pattern.permute.xlu0 0
        %1553 = vperm.xlu0 %1552, %v1269
        %v1554 = vpop.permute.xlu0 %1553
        %1557 = vset.pattern.permute.xlu0 0
        %1558 = vperm.xlu0 %1557, %v1270
        %v1559 = vpop.permute.xlu0 %1558
        %v1561 = vadd.f32 %v1465, %v1484
        %v1562 = vadd.f32 %v1466, %v1489
        %v1563 = vadd.f32 %v1467, %v1494
        %v1564 = vadd.f32 %v1468, %v1499
        %v1565 = vadd.f32 %v1469, %v1504
        %v1566 = vadd.f32 %v1470, %v1509
        %v1567 = vadd.f32 %v1471, %v1514
        %v1568 = vadd.f32 %v1472, %v1519
        %v1569 = vadd.f32 %v1473, %v1524
        %v1570 = vadd.f32 %v1474, %v1529
        %v1571 = vadd.f32 %v1475, %v1534
        %v1572 = vadd.f32 %v1476, %v1539
        %v1573 = vadd.f32 %v1477, %v1544
        %v1574 = vadd.f32 %v1478, %v1549
        %v1575 = vadd.f32 %v1479, %v1554
        %v1576 = vadd.f32 %v1480, %v1559
        %v1577 = vmax.f32 %v1561, 0.0
        %v1578 = vmax.f32 %v1562, 0.0
        %v1579 = vmax.f32 %v1563, 0.0
        %v1580 = vmax.f32 %v1564, 0.0
        %v1581 = vmax.f32 %v1565, 0.0
        %v1582 = vmax.f32 %v1566, 0.0
        %v1583 = vmax.f32 %v1567, 0.0
        %v1584 = vmax.f32 %v1568, 0.0
        %v1585 = vmax.f32 %v1569, 0.0
        %v1586 = vmax.f32 %v1570, 0.0
        %v1587 = vmax.f32 %v1571, 0.0
        %v1588 = vmax.f32 %v1572, 0.0
        %v1589 = vmax.f32 %v1573, 0.0
        %v1590 = vmax.f32 %v1574, 0.0
        %v1591 = vmax.f32 %v1575, 0.0
        %v1592 = vmax.f32 %v1576, 0.0
        %v1593 = vld [vmem:[#allocation14] sm:$0xf]
        %v1594 = vld [vmem:[#allocation14 + $0x4] sm:$0xf]
        %v1595 = vld [vmem:[#allocation14 + $0x8] sm:$0xf]
        %v1596 = vld [vmem:[#allocation14 + $0xc] sm:$0xf]
        %v1597 = vld [vmem:[#allocation14 + $0x10] sm:$0xf]
        %v1598 = vld [vmem:[#allocation14 + $0x14] sm:$0xf]
        %v1599 = vld [vmem:[#allocation14 + $0x18] sm:$0xf]
        %v1600 = vld [vmem:[#allocation14 + $0x1c] sm:$0xf]
        %v1601 = vld [vmem:[#allocation14 + $0x20] sm:$0xf]
        %v1602 = vld [vmem:[#allocation14 + $0x24] sm:$0xf]
        %v1603 = vld [vmem:[#allocation14 + $0x28] sm:$0xf]
        %v1604 = vld [vmem:[#allocation14 + $0x2c] sm:$0xf]
        %v1605 = vld [vmem:[#allocation14 + $0x30] sm:$0xf]
        %v1606 = vld [vmem:[#allocation14 + $0x34] sm:$0xf]
        %v1607 = vld [vmem:[#allocation14 + $0x38] sm:$0xf]
        %v1608 = vld [vmem:[#allocation14 + $0x3c] sm:$0xf]
        %v1609 = vld [vmem:[#allocation16] sm:$0xff]
        %v1610 = vld [vmem:[#allocation16 + $0x8] sm:$0xff]
        %v1611 = vld [vmem:[#allocation16 + $0x10] sm:$0xff]
        %v1612 = vld [vmem:[#allocation16 + $0x18] sm:$0xff]
        %v1613 = vld [vmem:[#allocation16 + $0x20] sm:$0xff]
        %v1614 = vld [vmem:[#allocation16 + $0x28] sm:$0xff]
        %v1615 = vld [vmem:[#allocation16 + $0x30] sm:$0xff]
        %v1616 = vld [vmem:[#allocation16 + $0x38] sm:$0xff]
        %v1617 = vld [vmem:[#allocation16 + $0x40] sm:$0xff]
        %v1618 = vld [vmem:[#allocation16 + $0x48] sm:$0xff]
        %v1619 = vld [vmem:[#allocation16 + $0x50] sm:$0xff]
        %v1620 = vld [vmem:[#allocation16 + $0x58] sm:$0xff]
        %v1621 = vld [vmem:[#allocation16 + $0x60] sm:$0xff]
        %v1622 = vld [vmem:[#allocation16 + $0x68] sm:$0xff]
        %v1623 = vld [vmem:[#allocation16 + $0x70] sm:$0xff]
        %v1624 = vld [vmem:[#allocation16 + $0x78] sm:$0xff]
        %v1625 = vpack.c.bf16 %v1578, %v1577
        %v1626 = vpack.c.bf16 %v1580, %v1579
        %v1627 = vpack.c.bf16 %v1582, %v1581
        %v1628 = vpack.c.bf16 %v1584, %v1583
        %v1629 = vpack.c.bf16 %v1586, %v1585
        %v1630 = vpack.c.bf16 %v1588, %v1587
        %v1631 = vpack.c.bf16 %v1590, %v1589
        %v1632 = vpack.c.bf16 %v1592, %v1591
        %1634 = vset.pattern.permute.xlu0 0
        %1635 = vperm.xlu0 %1634, %v1609
        %v1636 = vpop.permute.xlu0 %1635
        %1639 = vset.pattern.permute.xlu0 0
        %1640 = vperm.xlu0 %1639, %v1610
        %v1641 = vpop.permute.xlu0 %1640
        %1644 = vset.pattern.permute.xlu0 0
        %1645 = vperm.xlu0 %1644, %v1611
        %v1646 = vpop.permute.xlu0 %1645
        %1649 = vset.pattern.permute.xlu0 0
        %1650 = vperm.xlu0 %1649, %v1612
        %v1651 = vpop.permute.xlu0 %1650
        %1654 = vset.pattern.permute.xlu0 0
        %1655 = vperm.xlu0 %1654, %v1613
        %v1656 = vpop.permute.xlu0 %1655
        %1659 = vset.pattern.permute.xlu0 0
        %1660 = vperm.xlu0 %1659, %v1614
        %v1661 = vpop.permute.xlu0 %1660
        %1664 = vset.pattern.permute.xlu0 0
        %1665 = vperm.xlu0 %1664, %v1615
        %v1666 = vpop.permute.xlu0 %1665
        %1669 = vset.pattern.permute.xlu0 0
        %1670 = vperm.xlu0 %1669, %v1616
        %v1671 = vpop.permute.xlu0 %1670
        %1674 = vset.pattern.permute.xlu0 0
        %1675 = vperm.xlu0 %1674, %v1617
        %v1676 = vpop.permute.xlu0 %1675
        %1679 = vset.pattern.permute.xlu0 0
        %1680 = vperm.xlu0 %1679, %v1618
        %v1681 = vpop.permute.xlu0 %1680
        %1684 = vset.pattern.permute.xlu0 0
        %1685 = vperm.xlu0 %1684, %v1619
        %v1686 = vpop.permute.xlu0 %1685
        %1689 = vset.pattern.permute.xlu0 0
        %1690 = vperm.xlu0 %1689, %v1620
        %v1691 = vpop.permute.xlu0 %1690
        %1694 = vset.pattern.permute.xlu0 0
        %1695 = vperm.xlu0 %1694, %v1621
        %v1696 = vpop.permute.xlu0 %1695
        %1699 = vset.pattern.permute.xlu0 0
        %1700 = vperm.xlu0 %1699, %v1622
        %v1701 = vpop.permute.xlu0 %1700
        %1704 = vset.pattern.permute.xlu0 0
        %1705 = vperm.xlu0 %1704, %v1623
        %v1706 = vpop.permute.xlu0 %1705
        %1709 = vset.pattern.permute.xlu0 0
        %1710 = vperm.xlu0 %1709, %v1624
        %v1711 = vpop.permute.xlu0 %1710
        %v1729 = vunpack.c.l.b16 %v1593
        %v1730 = vunpack.c.l.b16 %v1594
        %v1731 = vunpack.c.l.b16 %v1595
        %v1732 = vunpack.c.l.b16 %v1596
        %v1733 = vunpack.c.l.b16 %v1597
        %v1734 = vunpack.c.l.b16 %v1598
        %v1735 = vunpack.c.l.b16 %v1599
        %v1736 = vunpack.c.l.b16 %v1600
        %v1737 = vunpack.c.l.b16 %v1601
        %v1738 = vunpack.c.l.b16 %v1602
        %v1739 = vunpack.c.l.b16 %v1603
        %v1740 = vunpack.c.l.b16 %v1604
        %v1741 = vunpack.c.l.b16 %v1605
        %v1742 = vunpack.c.l.b16 %v1606
        %v1743 = vunpack.c.l.b16 %v1607
        %v1744 = vunpack.c.l.b16 %v1608
        %v1745 = vpack.c.b16 %v1730, %v1729
        %v1746 = vpack.c.b16 %v1732, %v1731
        %v1747 = vpack.c.b16 %v1734, %v1733
        %v1748 = vpack.c.b16 %v1736, %v1735
        %v1749 = vpack.c.b16 %v1738, %v1737
        %v1750 = vpack.c.b16 %v1740, %v1739
        %v1751 = vpack.c.b16 %v1742, %v1741
        %v1752 = vpack.c.b16 %v1744, %v1743
        %1761 = vmatprep.subr.bf16.mxu0 0
        %1762 = vmatpush1.bf16.msra.mxu0 %v1625
        %1763 = vmatprep.subr.bf16.mxu0 0
        %1764 = vmatpush1.bf16.msra.mxu0 %v1626
        %1765 = vmatprep.subr.bf16.mxu0 0
        %1766 = vmatpush1.bf16.msra.mxu0 %v1627
        %1767 = vmatprep.subr.bf16.mxu0 0
        %1768 = vmatpush1.bf16.msra.mxu0 %v1628
        %1769 = vmatprep.subr.bf16.mxu0 0
        %1770 = vmatpush1.bf16.msra.mxu0 %v1629
        %1771 = vmatprep.subr.bf16.mxu0 0
        %1772 = vmatpush1.bf16.msra.mxu0 %v1630
        %1773 = vmatprep.subr.bf16.mxu0 0
        %1774 = vmatpush1.bf16.msra.mxu0 %v1631
        %1775 = vmatprep.subr.bf16.mxu0 0
        %1776 = vmatpush1.bf16.msra.mxu0 %v1632
        %1777 = vmatprep.subr.bf16.mxu0 0
        %1778 = vmatpush1.bf16.msra.mxu0 0
        %1779 = vmatprep.subr.bf16.mxu0 0
        %1780 = vmatpush1.bf16.msra.mxu0 0
        %1781 = vmatprep.subr.bf16.mxu0 0
        %1782 = vmatpush1.bf16.msra.mxu0 0
        %1783 = vmatprep.subr.bf16.mxu0 0
        %1784 = vmatpush1.bf16.msra.mxu0 0
        %1785 = vmatprep.subr.bf16.mxu0 0
        %1786 = vmatpush1.bf16.msra.mxu0 0
        %1787 = vmatprep.subr.bf16.mxu0 0
        %1788 = vmatpush1.bf16.msra.mxu0 0
        %1789 = vmatprep.subr.bf16.mxu0 0
        %1790 = vmatpush1.bf16.msra.mxu0 0
        %1791 = vmatprep.subr.bf16.mxu0 0
        %1792 = vmatpush1.bf16.msra.mxu0 0
        %1793 = vmatprep.mubr.bf16.mxu0 0
        %1794 = vmatmul.mubr.bf16.gmra.mrb[0].mxu0 %v1745
        %v1795 = vpop.f32.mrb[0].mxu0
        %v1796 = vadd.f32 %v1636, %v1795
        %v1797 = vpop.f32.mrb[0].mxu0
        %v1798 = vpop.f32.mrb[0].mxu0
        %v1799 = vadd.f32 %v1641, %v1798
        %v1800 = vpop.f32.mrb[0].mxu0
        %1801 = vmatprep.mubr.bf16.mxu0 0
        %1802 = vmatmul.mubr.bf16.gmra.mrb[0].mxu0 %v1746
        %v1803 = vpop.f32.mrb[0].mxu0
        %v1804 = vadd.f32 %v1646, %v1803
        %v1805 = vpop.f32.mrb[0].mxu0
        %v1806 = vpop.f32.mrb[0].mxu0
        %v1807 = vadd.f32 %v1651, %v1806
        %v1808 = vpop.f32.mrb[0].mxu0
        %1809 = vmatprep.mubr.bf16.mxu0 0
        %1810 = vmatmul.mubr.bf16.gmra.mrb[0].mxu0 %v1747
        %v1811 = vpop.f32.mrb[0].mxu0
        %v1812 = vadd.f32 %v1656, %v1811
        %v1813 = vpop.f32.mrb[0].mxu0
        %v1814 = vpop.f32.mrb[0].mxu0
        %v1815 = vadd.f32 %v1661, %v1814
        %v1816 = vpop.f32.mrb[0].mxu0
        %1817 = vmatprep.mubr.bf16.mxu0 0
        %1818 = vmatmul.mubr.bf16.gmra.mrb[0].mxu0 %v1748
        %v1819 = vpop.f32.mrb[0].mxu0
        %v1820 = vadd.f32 %v1666, %v1819
        %v1821 = vpop.f32.mrb[0].mxu0
        %v1822 = vpop.f32.mrb[0].mxu0
        %v1823 = vadd.f32 %v1671, %v1822
        %v1824 = vpop.f32.mrb[0].mxu0
        %1825 = vmatprep.mubr.bf16.mxu0 0
        %1826 = vmatmul.mubr.bf16.gmra.mrb[0].mxu0 %v1749
        %v1827 = vpop.f32.mrb[0].mxu0
        %v1828 = vadd.f32 %v1676, %v1827
        %v1829 = vpop.f32.mrb[0].mxu0
        %v1830 = vpop.f32.mrb[0].mxu0
        %v1831 = vadd.f32 %v1681, %v1830
        %v1832 = vpop.f32.mrb[0].mxu0
        %1833 = vmatprep.mubr.bf16.mxu0 0
        %1834 = vmatmul.mubr.bf16.gmra.mrb[0].mxu0 %v1750
        %v1835 = vpop.f32.mrb[0].mxu0
        %v1836 = vadd.f32 %v1686, %v1835
        %v1837 = vpop.f32.mrb[0].mxu0
        %v1838 = vpop.f32.mrb[0].mxu0
        %v1839 = vadd.f32 %v1691, %v1838
        %v1840 = vpop.f32.mrb[0].mxu0
        %1841 = vmatprep.mubr.bf16.mxu0 0
        %1842 = vmatmul.mubr.bf16.gmra.mrb[0].mxu0 %v1751
        %v1843 = vpop.f32.mrb[0].mxu0
        %v1844 = vadd.f32 %v1696, %v1843
        %v1845 = vpop.f32.mrb[0].mxu0
        %v1846 = vpop.f32.mrb[0].mxu0
        %v1847 = vadd.f32 %v1701, %v1846
        %v1848 = vpop.f32.mrb[0].mxu0
        %1849 = vmatprep.mubr.bf16.mxu0 0
        %1850 = vmatmul.mubr.bf16.gmra.mrb[0].mxu0 %v1752
        %v1851 = vpop.f32.mrb[0].mxu0
        %v1852 = vadd.f32 %v1706, %v1851
        %v1853 = vpop.f32.mrb[0].mxu0
        %v1854 = vpop.f32.mrb[0].mxu0
        %v1855 = vadd.f32 %v1711, %v1854
        %v1856 = vpop.f32.mrb[0].mxu0
        %1857 = vdwg.mxu0
        %v1858 = vmax.f32 %v1796, 0.0
        %v1859 = vmax.f32 %v1799, 0.0
        %v1860 = vmax.f32 %v1804, 0.0
        %v1861 = vmax.f32 %v1807, 0.0
        %v1862 = vmax.f32 %v1812, 0.0
        %v1863 = vmax.f32 %v1815, 0.0
        %v1864 = vmax.f32 %v1820, 0.0
        %v1865 = vmax.f32 %v1823, 0.0
        %v1866 = vmax.f32 %v1828, 0.0
        %v1867 = vmax.f32 %v1831, 0.0
        %v1868 = vmax.f32 %v1836, 0.0
        %v1869 = vmax.f32 %v1839, 0.0
        %v1870 = vmax.f32 %v1844, 0.0
        %v1871 = vmax.f32 %v1847, 0.0
        %v1872 = vmax.f32 %v1852, 0.0
        %v1873 = vmax.f32 %v1855, 0.0
        %v1874 = vld [vmem:[#allocation17] sm:$0xff]
        %v1875 = vld [vmem:[#allocation19] sm:$0xff]
        %1877 = vset.pattern.permute.xlu0 0
        %1878 = vperm.xlu0 %1877, %v1875
        %v1879 = vpop.permute.xlu0 %1878
        %1881 = vmatprep.subr.mxu0 0.0
        %1882 = vmatpush1.msra.mxu0 %v1858
        %1883 = vmatprep.subr.mxu0 0.0
        %1884 = vmatpush1.msra.mxu0 %v1859
        %1885 = vmatprep.subr.mxu0 0.0
        %1886 = vmatpush1.msra.mxu0 %v1860
        %1887 = vmatprep.subr.mxu0 0.0
        %1888 = vmatpush1.msra.mxu0 %v1861
        %1889 = vmatprep.subr.mxu0 0.0
        %1890 = vmatpush1.msra.mxu0 %v1862
        %1891 = vmatprep.subr.mxu0 0.0
        %1892 = vmatpush1.msra.mxu0 %v1863
        %1893 = vmatprep.subr.mxu0 0.0
        %1894 = vmatpush1.msra.mxu0 %v1864
        %1895 = vmatprep.subr.mxu0 0.0
        %1896 = vmatpush1.msra.mxu0 %v1865
        %1897 = vmatprep.subr.mxu0 0.0
        %1898 = vmatpush1.msra.mxu0 %v1866
        %1899 = vmatprep.subr.mxu0 0.0
        %1900 = vmatpush1.msra.mxu0 %v1867
        %1901 = vmatprep.subr.mxu0 0.0
        %1902 = vmatpush1.msra.mxu0 %v1868
        %1903 = vmatprep.subr.mxu0 0.0
        %1904 = vmatpush1.msra.mxu0 %v1869
        %1905 = vmatprep.subr.mxu0 0.0
        %1906 = vmatpush1.msra.mxu0 %v1870
        %1907 = vmatprep.subr.mxu0 0.0
        %1908 = vmatpush1.msra.mxu0 %v1871
        %1909 = vmatprep.subr.mxu0 0.0
        %1910 = vmatpush1.msra.mxu0 %v1872
        %1911 = vmatprep.subr.mxu0 0.0
        %1912 = vmatpush1.msra.mxu0 %v1873
        %1913 = vmatprep.subr.mxu0 0.0
        %1914 = vmatpush1.msra.mxu0 0.0
        %1915 = vmatprep.subr.mxu0 0.0
        %1916 = vmatpush1.msra.mxu0 0.0
        %1917 = vmatprep.subr.mxu0 0.0
        %1918 = vmatpush1.msra.mxu0 0.0
        %1919 = vmatprep.subr.mxu0 0.0
        %1920 = vmatpush1.msra.mxu0 0.0
        %1921 = vmatprep.subr.mxu0 0.0
        %1922 = vmatpush1.msra.mxu0 0.0
        %1923 = vmatprep.subr.mxu0 0.0
        %1924 = vmatpush1.msra.mxu0 0.0
        %1925 = vmatprep.subr.mxu0 0.0
        %1926 = vmatpush1.msra.mxu0 0.0
        %1927 = vmatprep.subr.mxu0 0.0
        %1928 = vmatpush1.msra.mxu0 0.0
        %1929 = vmatprep.subr.mxu0 0.0
        %1930 = vmatpush1.msra.mxu0 0.0
        %1931 = vmatprep.subr.mxu0 0.0
        %1932 = vmatpush1.msra.mxu0 0.0
        %1933 = vmatprep.subr.mxu0 0.0
        %1934 = vmatpush1.msra.mxu0 0.0
        %1935 = vmatprep.subr.mxu0 0.0
        %1936 = vmatpush1.msra.mxu0 0.0
        %1937 = vmatprep.subr.mxu0 0.0
        %1938 = vmatpush1.msra.mxu0 0.0
        %1939 = vmatprep.subr.mxu0 0.0
        %1940 = vmatpush1.msra.mxu0 0.0
        %1941 = vmatprep.subr.mxu0 0.0
        %1942 = vmatpush1.msra.mxu0 0.0
        %1943 = vmatprep.subr.mxu0 0.0
        %1944 = vmatpush1.msra.mxu0 0.0
        %1945 = vmatprep.mubr.f32.mxu0 0.0
        %1946 = vmatmul.mubr.f32.gmra.mrb[0].mxu0 %v1874
        %v1947 = vpop.f32.mrb[0].mxu0
        %v1948 = vadd.f32 %v1879, %v1947
        %v1949 = vpop.f32.mrb[0].mxu0
        %1950 = vdwg.mxu0
        %1951 = vst [vmem:[%s564] sm:$0xff] %v1948
        %s1952 = sand.u32 %s284, 1
        %s1953 = scalar_lea.sflag [#allocation4], %s1952
        %s1954 = sand.u32 %s284, 1
        %s1955 = smul.addr %s1954, 8
        %s1956 = scalar_lea.vmem [#allocation20], %s1955
        // Predicated region
        $region109: #{tpu_custom_call.1} parent=63 // pred_check
          %p1957 = pneg %p294
        $region110: #{tpu_custom_call.1} parent=63 // pred_check_branch
          %1959 = sbr.rel (%p1957) target = $region112
        $region111: #{tpu_custom_call.1} parent=63 // pred_region
          %s1961 = ssub.s32 128, 128
          %1962 = vsyncadd %s1953, %s1961
          %s1963 = smul.addr %s35, 128
          %s1964 = scalar_lea.hbm %s11, %s1963
          %s1966 = sshll.u32 %s1956, 4
          %s1967 = int_to_ptr.vmem [resolvable:$true] %s1966
          %1969 = dma.vmem_to_hbm [thread:$0]  %s1967, 128, %s1964, %s1953
        $region112: #{tpu_custom_call.1} parent=63 // pred_fallthru
          _
      $region64: #{tpu_custom_call.1} parent=5 // pred_fallthru
        _
      %p1970 = scmp.le.s32.totalorder 2, %s30
      // Predicated region
      $region113: #{tpu_custom_call.1} parent=5 // pred_check
        %p1971 = pneg %p1970
      $region114: #{tpu_custom_call.1} parent=5 // pred_check_branch
        %1973 = sbr.rel (%p1971) target = $region116
      $region115: #{tpu_custom_call.1} parent=5 // pred_region
        %s1974 = ssub.s32 %s30, 2
        // Predicated region
        $region117: #{tpu_custom_call.1} parent=115 // pred_check
          %p1975 = pneg %p300
        $region118: #{tpu_custom_call.1} parent=115 // pred_check_branch
          %1977 = sbr.rel (%p1975) target = $region120
        $region119: #{tpu_custom_call.1} parent=115 // pred_region
          %s1978 = sand.u32 %s285, 1
          %s1979 = scalar_lea.sflag [#allocation4], %s1978
          %s1980 = sand.u32 %s285, 1
          %s1981 = smul.addr %s1980, 8
          %s1982 = scalar_lea.vmem [#allocation20], %s1981
          %1983 = dma.done %s1979, 128
        $region120: #{tpu_custom_call.1} parent=115 // pred_fallthru
          _
      $region116: #{tpu_custom_call.1} parent=5 // pred_fallthru
        _
    $region6: #{tpu_custom_call.1} parent=1 // loop_footer
      %s34 = sadd.s32 1, %s30
    $region7: #{tpu_custom_call.1} parent=1 // loop_footer_branch
      %29 = sbr.rel target = $region3
    $region8: #{tpu_custom_call.1} parent=1 // loop_exit
      _
    %1984 = vsyncpa [#allocation3], 1
    %s1985 = scalar_lea.sflag [#allocation3], 1
    %1986 = vsyncpa %s1985, 1
    %1987 = vsyncpa [#allocation6], 1
    %s1988 = scalar_lea.sflag [#allocation6], 1
    %1989 = vsyncpa %s1988, 1
    %1990 = vsyncpa [#allocation9], 1
    %1991 = vsyncpa [#allocation12], 1
    %1992 = vsyncpa [#allocation15], 1
    %1993 = vsyncpa [#allocation18], 1
    %1994 = vsyncpa [#allocation4], 1
    %s1995 = scalar_lea.sflag [#allocation4], 1
    %1996 = vsyncpa %s1995, 1

</llo_original>
